<compile_context>
chip_gen: v5e
topology: v5e:2x2
jax: 0.10.0
libtpu: 0.0.40
codegen_flags: <defaults>
</compile_context>

<pallas_src>
import numpy as np
import jax
import jax.numpy as jnp
from jax import lax
from jax.experimental import pallas as pl
from jax.experimental.pallas import tpu as pltpu

K = 5            # conv kernel size (both convs)
POOL_OUT = 5     # adaptive pool target (see TODO above)
C_IN, C1, C2 = 3, 6, 16
BB_MAX = 1024    # max batch rows per grid step (few-MiB working set everywhere)


# ----------------------------- trace-time helpers ---------------------------
def _round_up(a, b):
    return -(-a // b) * b


def _adaptive_avg_pool_matrix(in_h, in_w, out_h, out_w):
    """(out_h*out_w, in_h*in_w) numpy matrix implementing nn.AdaptiveAvgPool2d."""
    m = np.zeros((out_h * out_w, in_h * in_w), dtype=np.float32)
    for oi in range(out_h):
        hs, he = (oi * in_h) // out_h, -((-(oi + 1) * in_h) // out_h)
        for oj in range(out_w):
            ws, we = (oj * in_w) // out_w, -((-(oj + 1) * in_w) // out_w)
            inv = 1.0 / ((he - hs) * (we - ws))
            for si in range(hs, he):
                for sj in range(ws, we):
                    m[oi * out_w + oj, si * in_w + sj] = inv
    return m


def _conv1_gather_index(h, w):
    """(C_IN*h*w, oh*ow) int32 map: flat (cin,kh,kw) index, or nf for 'zero'."""
    oh, ow = h - K + 1, w - K + 1
    nf = C_IN * K * K
    idx = np.full((C_IN * h * w, oh * ow), nf, np.int32)
    for i in range(oh):
        for j in range(ow):
            p = i * ow + j
            for cin in range(C_IN):
                for kh in range(K):
                    for kw in range(K):
                        q = cin * h * w + (i + kh) * w + (j + kw)
                        idx[q, p] = cin * K * K + kh * K + kw
    return idx


# ------------------------------ fused Pallas kernel -------------------------
def _cnn_fused_kernel(x_ref, w1_ref, b1_ref, w2_ref, b2_ref,
                      f1w_ref, f1b_ref, f2w_ref, f2b_ref, f3w_ref, f3b_ref,
                      o_ref):
    # conv1 folded into one dense (C*H*W, ns*6) matmul; bias+ReLU in f32.
    y1 = jnp.dot(x_ref[...], w1_ref[...], preferred_element_type=jnp.float32)
    y1 = jnp.maximum(y1 + b1_ref[...], 0.0)                      # (bb, ns*6)

    # adaptive-pool(->5x5) + conv2(5x5 valid -> 1x1): ONE (bb,600)@(600,16).
    y2 = jnp.dot(y1.astype(w2_ref.dtype), w2_ref[...],
                 preferred_element_type=jnp.float32)
    y2 = jnp.maximum(y2 + b2_ref[...], 0.0)                      # (bb, 16)

    # pool(1x1 -> 5x5 replication) + view(-1,400) + fc1 folded into (16,120).
    h1 = jnp.maximum(
        jnp.dot(y2.astype(f1w_ref.dtype), f1w_ref[...],
                preferred_element_type=jnp.float32) + f1b_ref[...], 0.0)
    h2 = jnp.maximum(
        jnp.dot(h1.astype(f2w_ref.dtype), f2w_ref[...],
                preferred_element_type=jnp.float32) + f2b_ref[...], 0.0)
    o_ref[...] = (jnp.dot(h2.astype(f3w_ref.dtype), f3w_ref[...],
                          preferred_element_type=jnp.float32)
                  + f3b_ref[...])                                # (bb, 10)


# ------------------------------ forward wrapper -----------------------------
def cnn_forward(x, params):
    n, c, h, w = x.shape
    assert c == C_IN and h >= K and w >= K
    oh1, ow1 = h - K + 1, w - K + 1
    ns = oh1 * ow1
    npool = POOL_OUT * POOL_OUT
    nf = C_IN * K * K
    chw = C_IN * h * w

    dt = jnp.bfloat16     # streamed operands / weights; all accumulation in f32

    # --- batch tiling: many modest "parallel" blocks ---
    bb = min(BB_MAX, _round_up(n, 8))
    if n > 8 and _round_up(n, bb) // bb < 2:      # keep >=2 blocks for v7x 2xTC
        bb = max(8, _round_up((n + 1) // 2, 8))
    n_pad = _round_up(n, bb)
    grid = (n_pad // bb,)

    x2d = x.reshape(n, chw)
    if n_pad != n:
        x2d = jnp.pad(x2d, ((0, n_pad - n), (0, 0)))
    x2d = x2d.astype(dt)

    # --- trace-time weight folding (tiny XLA glue, no extra kernel traffic) --
    # conv1 -> dense (C*H*W, ns*6): column p*6+c = filter c placed at output p.
    w1_mat = params["w1"].reshape(C1, nf).T                          # (75, 6)
    w1_pad = jnp.concatenate([w1_mat, jnp.zeros((1, C1), w1_mat.dtype)], axis=0)
    w1_full = w1_pad[_conv1_gather_index(h, w)].reshape(chw, ns * C1).astype(dt)
    b1 = jnp.tile(params["b1"], ns).reshape(1, ns * C1)

    # adaptive pool (oh1,ow1)->(5,5) + conv2 folded into (ns*6, 16).
    pmat = jnp.asarray(_adaptive_avg_pool_matrix(oh1, ow1, POOL_OUT, POOL_OUT))
    w2_r = params["w2"].reshape(C2, C1, npool)                       # (16, 6, 25)
    w2_eff = jnp.einsum("sp,ocs->pco", pmat, w2_r).reshape(ns * C1, C2).astype(dt)
    b2 = params["b2"].reshape(1, C2)

    # replication pool + view folded into fc1.
    f1w = params["fc1_w"].T.reshape(C2, npool, 120).sum(axis=1).astype(dt)
    f1b = params["fc1_b"].reshape(1, 120)
    f2w = params["fc2_w"].T.astype(dt)
    f2b = params["fc2_b"].reshape(1, 84)
    f3w = params["fc3_w"].T.astype(dt)
    f3b = params["fc3_b"].reshape(1, 10)

    def const(shape):
        nd = len(shape)
        return pl.BlockSpec(shape, lambda i, _nd=nd: (0,) * _nd)

    out = pl.pallas_call(
        _cnn_fused_kernel,
        out_shape=jax.ShapeDtypeStruct((n_pad, 10), jnp.float32),
        grid=grid,
        in_specs=[
            pl.BlockSpec((bb, chw), lambda i: (i, 0)),    # raw image block (bf16)
            const((chw, ns * C1)), const((1, ns * C1)),   # conv1 fold, bias
            const((ns * C1, C2)), const((1, C2)),         # pool+conv2 fold, bias
            const((C2, 120)), const((1, 120)),            # fc1 (replication fold)
            const((120, 84)), const((1, 84)),             # fc2
            const((84, 10)), const((1, 10)),              # fc3
        ],
        out_specs=pl.BlockSpec((bb, 10), lambda i: (i, 0)),
        compiler_params=pltpu.CompilerParams(
            dimension_semantics=("parallel",),
            vmem_limit_bytes=32 * 1024 * 1024),
    )(x2d, w1_full, b1, w2_eff, b2, f1w, f1b, f2w, f2b, f3w, f3b)

    return out[:n]


# ----------------------- deterministic parameter init -----------------------
def init_params(key):
    def u(k, shape, fan_in):
        bound = 1.0 / np.sqrt(fan_in)
        return jax.random.uniform(k, shape, jnp.float32, -bound, bound)

    ks = jax.random.split(key, 10)
    return {
        "w1": u(ks[0], (6, 3, 5, 5), 3 * 25), "b1": u(ks[1], (6,), 3 * 25),
        "w2": u(ks[2], (16, 6, 5, 5), 6 * 25), "b2": u(ks[3], (16,), 6 * 25),
        "fc1_w": u(ks[4], (120, 400), 400), "fc1_b": u(ks[5], (120,), 400),
        "fc2_w": u(ks[6], (84, 120), 120), "fc2_b": u(ks[7], (84,), 120),
        "fc3_w": u(ks[8], (10, 84), 84), "fc3_b": u(ks[9], (10,), 84),
    }


# ------------------------------ pure-JAX reference --------------------------
def ref_forward(x, p):
    dn = ("NCHW", "OIHW", "NCHW")
    y = lax.conv_general_dilated(x, p["w1"], (1, 1), "VALID",
                                 dimension_numbers=dn)
    y = jnp.maximum(y + p["b1"][None, :, None, None], 0.0)
    n, c, hh, ww = y.shape
    pm = jnp.asarray(_adaptive_avg_pool_matrix(hh, ww, POOL_OUT, POOL_OUT))
    y = jnp.einsum("sq,ncq->ncs", pm, y.reshape(n, c, hh * ww))
    y = y.reshape(n, c, POOL_OUT, POOL_OUT)
    y = lax.conv_general_dilated(y, p["w2"], (1, 1), "VALID",
                                 dimension_numbers=dn)
    y = jnp.maximum(y + p["b2"][None, :, None, None], 0.0)        # (N,16,1,1)
    y = jnp.broadcast_to(y, (n, 16, POOL_OUT, POOL_OUT)).reshape(n, 16 * 25)
    h1 = jnp.maximum(y @ p["fc1_w"].T + p["fc1_b"], 0.0)
    h2 = jnp.maximum(h1 @ p["fc2_w"].T + p["fc2_b"], 0.0)
    return h2 @ p["fc3_w"].T + p["fc3_b"]


if __name__ == "__main__":
    key = jax.random.PRNGKey(0)
    kx, kp = jax.random.split(key)
    x = jax.random.normal(kx, (2, 3, 14, 14), jnp.float32)   # NCHW like PyTorch
    params = init_params(kp)

    out = jax.jit(cnn_forward)(x, params)
    out = jax.block_until_ready(out)

    ref = ref_forward(x, params)
    assert out.shape == (2, 10)
    # bf16-streamed operands with f32 accumulation -> ~1e-3..1e-2 abs deltas.
    np.testing.assert_allclose(np.asarray(out), np.asarray(ref),
                               rtol=3e-2, atol=3e-2)
    print("KERNEL_OK")
</pallas_src>

<mosaic_0001>
module attributes {stable_mosaic.version = 11 : i64} {
  func.func @_cnn_fused_kernel(%arg0: i32, %arg1: memref<8x588xbf16, #tpu.memory_space<vmem>>, %arg2: memref<588x600xbf16, #tpu.memory_space<vmem>>, %arg3: memref<1x600xf32, #tpu.memory_space<vmem>>, %arg4: memref<600x16xbf16, #tpu.memory_space<vmem>>, %arg5: memref<1x16xf32, #tpu.memory_space<vmem>>, %arg6: memref<16x120xbf16, #tpu.memory_space<vmem>>, %arg7: memref<1x120xf32, #tpu.memory_space<vmem>>, %arg8: memref<120x84xbf16, #tpu.memory_space<vmem>>, %arg9: memref<1x84xf32, #tpu.memory_space<vmem>>, %arg10: memref<84x10xbf16, #tpu.memory_space<vmem>>, %arg11: memref<1x10xf32, #tpu.memory_space<vmem>>, %arg12: memref<8x10xf32, #tpu.memory_space<vmem>>) attributes {dimension_semantics = [#tpu.dimension_semantics<parallel>], iteration_bounds = array<i64: 1>, scalar_prefetch = 0 : i64, scratch_operands = 0 : i64, tpu.core_type = #tpu.core_type<tc>, window_params = [{transform_indices = @transform_0, window_bounds = array<i64: 8, 588>}, {pipeline_mode = #tpu.pipeline_mode<synchronous>, transform_indices = @transform_1, window_bounds = array<i64: 588, 600>}, {pipeline_mode = #tpu.pipeline_mode<synchronous>, transform_indices = @transform_2, window_bounds = array<i64: 1, 600>}, {pipeline_mode = #tpu.pipeline_mode<synchronous>, transform_indices = @transform_3, window_bounds = array<i64: 600, 16>}, {pipeline_mode = #tpu.pipeline_mode<synchronous>, transform_indices = @transform_4, window_bounds = array<i64: 1, 16>}, {pipeline_mode = #tpu.pipeline_mode<synchronous>, transform_indices = @transform_5, window_bounds = array<i64: 16, 120>}, {pipeline_mode = #tpu.pipeline_mode<synchronous>, transform_indices = @transform_6, window_bounds = array<i64: 1, 120>}, {pipeline_mode = #tpu.pipeline_mode<synchronous>, transform_indices = @transform_7, window_bounds = array<i64: 120, 84>}, {pipeline_mode = #tpu.pipeline_mode<synchronous>, transform_indices = @transform_8, window_bounds = array<i64: 1, 84>}, {pipeline_mode = #tpu.pipeline_mode<synchronous>, transform_indices = @transform_9, window_bounds = array<i64: 84, 10>}, {pipeline_mode = #tpu.pipeline_mode<synchronous>, transform_indices = @transform_10, window_bounds = array<i64: 1, 10>}, {transform_indices = @transform_11, window_bounds = array<i64: 8, 10>}]} {
    %c0 = arith.constant 0 : index
    %c0_0 = arith.constant 0 : index
    %0 = vector.load %arg1[%c0, %c0_0] : memref<8x588xbf16, #tpu.memory_space<vmem>>, vector<8x588xbf16>
    %c0_1 = arith.constant 0 : index
    %c0_2 = arith.constant 0 : index
    %1 = vector.load %arg2[%c0_1, %c0_2] : memref<588x600xbf16, #tpu.memory_space<vmem>>, vector<588x600xbf16>
    %cst = arith.constant dense<0.000000e+00> : vector<8x600xf32>
    %2 = tpu.matmul %0, %1, %cst {dimension_numbers = #tpu.dot_dimension_numbers<[1], [0], [0], [1], [0, 0, 1, 1], [], []>} : vector<8x588xbf16>, vector<588x600xbf16>, vector<8x600xf32> -> vector<8x600xf32>
    %c0_3 = arith.constant 0 : index
    %c0_4 = arith.constant 0 : index
    %3 = vector.load %arg3[%c0_3, %c0_4] : memref<1x600xf32, #tpu.memory_space<vmem>>, vector<1x600xf32>
    %4 = vector.broadcast %3 : vector<1x600xf32> to vector<8x600xf32>
    %5 = arith.addf %2, %4 : vector<8x600xf32>
    %cst_5 = arith.constant 0.000000e+00 : f32
    %6 = vector.broadcast %cst_5 : f32 to vector<8x600xf32>
    %7 = arith.maximumf %5, %6 : vector<8x600xf32>
    %8 = arith.truncf %7 : vector<8x600xf32> to vector<8x600xbf16>
    %c0_6 = arith.constant 0 : index
    %c0_7 = arith.constant 0 : index
    %9 = vector.load %arg4[%c0_6, %c0_7] : memref<600x16xbf16, #tpu.memory_space<vmem>>, vector<600x16xbf16>
    %cst_8 = arith.constant dense<0.000000e+00> : vector<8x16xf32>
    %10 = tpu.matmul %8, %9, %cst_8 {dimension_numbers = #tpu.dot_dimension_numbers<[1], [0], [0], [1], [0, 0, 1, 1], [], []>} : vector<8x600xbf16>, vector<600x16xbf16>, vector<8x16xf32> -> vector<8x16xf32>
    %c0_9 = arith.constant 0 : index
    %c0_10 = arith.constant 0 : index
    %11 = vector.load %arg5[%c0_9, %c0_10] : memref<1x16xf32, #tpu.memory_space<vmem>>, vector<1x16xf32>
    %12 = vector.broadcast %11 : vector<1x16xf32> to vector<8x16xf32>
    %13 = arith.addf %10, %12 : vector<8x16xf32>
    %cst_11 = arith.constant 0.000000e+00 : f32
    %14 = vector.broadcast %cst_11 : f32 to vector<8x16xf32>
    %15 = arith.maximumf %13, %14 : vector<8x16xf32>
    %16 = arith.truncf %15 : vector<8x16xf32> to vector<8x16xbf16>
    %c0_12 = arith.constant 0 : index
    %c0_13 = arith.constant 0 : index
    %17 = vector.load %arg6[%c0_12, %c0_13] : memref<16x120xbf16, #tpu.memory_space<vmem>>, vector<16x120xbf16>
    %cst_14 = arith.constant dense<0.000000e+00> : vector<8x120xf32>
    %18 = tpu.matmul %16, %17, %cst_14 {dimension_numbers = #tpu.dot_dimension_numbers<[1], [0], [0], [1], [0, 0, 1, 1], [], []>} : vector<8x16xbf16>, vector<16x120xbf16>, vector<8x120xf32> -> vector<8x120xf32>
    %c0_15 = arith.constant 0 : index
    %c0_16 = arith.constant 0 : index
    %19 = vector.load %arg7[%c0_15, %c0_16] : memref<1x120xf32, #tpu.memory_space<vmem>>, vector<1x120xf32>
    %20 = vector.broadcast %19 : vector<1x120xf32> to vector<8x120xf32>
    %21 = arith.addf %18, %20 : vector<8x120xf32>
    %cst_17 = arith.constant 0.000000e+00 : f32
    %22 = vector.broadcast %cst_17 : f32 to vector<8x120xf32>
    %23 = arith.maximumf %21, %22 : vector<8x120xf32>
    %24 = arith.truncf %23 : vector<8x120xf32> to vector<8x120xbf16>
    %c0_18 = arith.constant 0 : index
    %c0_19 = arith.constant 0 : index
    %25 = vector.load %arg8[%c0_18, %c0_19] : memref<120x84xbf16, #tpu.memory_space<vmem>>, vector<120x84xbf16>
    %cst_20 = arith.constant dense<0.000000e+00> : vector<8x84xf32>
    %26 = tpu.matmul %24, %25, %cst_20 {dimension_numbers = #tpu.dot_dimension_numbers<[1], [0], [0], [1], [0, 0, 1, 1], [], []>} : vector<8x120xbf16>, vector<120x84xbf16>, vector<8x84xf32> -> vector<8x84xf32>
    %c0_21 = arith.constant 0 : index
    %c0_22 = arith.constant 0 : index
    %27 = vector.load %arg9[%c0_21, %c0_22] : memref<1x84xf32, #tpu.memory_space<vmem>>, vector<1x84xf32>
    %28 = vector.broadcast %27 : vector<1x84xf32> to vector<8x84xf32>
    %29 = arith.addf %26, %28 : vector<8x84xf32>
    %cst_23 = arith.constant 0.000000e+00 : f32
    %30 = vector.broadcast %cst_23 : f32 to vector<8x84xf32>
    %31 = arith.maximumf %29, %30 : vector<8x84xf32>
    %32 = arith.truncf %31 : vector<8x84xf32> to vector<8x84xbf16>
    %c0_24 = arith.constant 0 : index
    %c0_25 = arith.constant 0 : index
    %33 = vector.load %arg10[%c0_24, %c0_25] : memref<84x10xbf16, #tpu.memory_space<vmem>>, vector<84x10xbf16>
    %cst_26 = arith.constant dense<0.000000e+00> : vector<8x10xf32>
    %34 = tpu.matmul %32, %33, %cst_26 {dimension_numbers = #tpu.dot_dimension_numbers<[1], [0], [0], [1], [0, 0, 1, 1], [], []>} : vector<8x84xbf16>, vector<84x10xbf16>, vector<8x10xf32> -> vector<8x10xf32>
    %c0_27 = arith.constant 0 : index
    %c0_28 = arith.constant 0 : index
    %35 = vector.load %arg11[%c0_27, %c0_28] : memref<1x10xf32, #tpu.memory_space<vmem>>, vector<1x10xf32>
    %36 = vector.broadcast %35 : vector<1x10xf32> to vector<8x10xf32>
    %37 = arith.addf %34, %36 : vector<8x10xf32>
    %c0_29 = arith.constant 0 : index
    %c0_30 = arith.constant 0 : index
    %38 = vector.load %arg12[%c0_29, %c0_30] : memref<8x10xf32, #tpu.memory_space<vmem>>, vector<8x10xf32>
    tpu.vector_store %arg12[%c0_29, %c0_30], %37 {strides = array<i32>} : memref<8x10xf32, #tpu.memory_space<vmem>>, vector<8x10xf32>,
    return
  }
  func.func @transform_0(%arg0: i32) -> (i32, i32) {
    %c0_i32 = arith.constant 0 : i32
    %c0_i32_0 = arith.constant 0 : i32
    return %arg0, %c0_i32 : i32, i32
  }
  func.func @transform_1(%arg0: i32) -> (i32, i32) {
    %c0_i32 = arith.constant 0 : i32
    %c0_i32_0 = arith.constant 0 : i32
    %c0_i32_1 = arith.constant 0 : i32
    return %c0_i32, %c0_i32_0 : i32, i32
  }
  func.func @transform_2(%arg0: i32) -> (i32, i32) {
    %c0_i32 = arith.constant 0 : i32
    %c0_i32_0 = arith.constant 0 : i32
    %c0_i32_1 = arith.constant 0 : i32
    return %c0_i32, %c0_i32_0 : i32, i32
  }
  func.func @transform_3(%arg0: i32) -> (i32, i32) {
    %c0_i32 = arith.constant 0 : i32
    %c0_i32_0 = arith.constant 0 : i32
    %c0_i32_1 = arith.constant 0 : i32
    return %c0_i32, %c0_i32_0 : i32, i32
  }
  func.func @transform_4(%arg0: i32) -> (i32, i32) {
    %c0_i32 = arith.constant 0 : i32
    %c0_i32_0 = arith.constant 0 : i32
    %c0_i32_1 = arith.constant 0 : i32
    return %c0_i32, %c0_i32_0 : i32, i32
  }
  func.func @transform_5(%arg0: i32) -> (i32, i32) {
    %c0_i32 = arith.constant 0 : i32
    %c0_i32_0 = arith.constant 0 : i32
    %c0_i32_1 = arith.constant 0 : i32
    return %c0_i32, %c0_i32_0 : i32, i32
  }
  func.func @transform_6(%arg0: i32) -> (i32, i32) {
    %c0_i32 = arith.constant 0 : i32
    %c0_i32_0 = arith.constant 0 : i32
    %c0_i32_1 = arith.constant 0 : i32
    return %c0_i32, %c0_i32_0 : i32, i32
  }
  func.func @transform_7(%arg0: i32) -> (i32, i32) {
    %c0_i32 = arith.constant 0 : i32
    %c0_i32_0 = arith.constant 0 : i32
    %c0_i32_1 = arith.constant 0 : i32
    return %c0_i32, %c0_i32_0 : i32, i32
  }
  func.func @transform_8(%arg0: i32) -> (i32, i32) {
    %c0_i32 = arith.constant 0 : i32
    %c0_i32_0 = arith.constant 0 : i32
    %c0_i32_1 = arith.constant 0 : i32
    return %c0_i32, %c0_i32_0 : i32, i32
  }
  func.func @transform_9(%arg0: i32) -> (i32, i32) {
    %c0_i32 = arith.constant 0 : i32
    %c0_i32_0 = arith.constant 0 : i32
    %c0_i32_1 = arith.constant 0 : i32
    return %c0_i32, %c0_i32_0 : i32, i32
  }
  func.func @transform_10(%arg0: i32) -> (i32, i32) {
    %c0_i32 = arith.constant 0 : i32
    %c0_i32_0 = arith.constant 0 : i32
    %c0_i32_1 = arith.constant 0 : i32
    return %c0_i32, %c0_i32_0 : i32, i32
  }
  func.func @transform_11(%arg0: i32) -> (i32, i32) {
    %c0_i32 = arith.constant 0 : i32
    %c0_i32_0 = arith.constant 0 : i32
    return %arg0, %c0_i32 : i32, i32
  }
}

</mosaic_0001>

<llo_original>
// kernel: tile.8
$region0: #{tile.8}
  #allocation0 [shape = 's32[1]{0}', space=sflag, size = 0x4, scoped, tag = 'scoped memory for tile.8']
  %s0 = inlined_call_operand.vmem [shape: f32[6], index: 0, kind: input, shape index: {}]
  %s1 = inlined_call_operand.vmem [shape: f32[100,6], index: 1, kind: output, shape index: {}]
  // Predicated region
  $region2: #{tile.8} parent=0 // pred_check
    _
  $region3: #{tile.8} parent=0 // pred_check_branch
    %3 = sbr.rel (0) target = $region5
  $region4: #{tile.8} parent=0 // pred_region
    _
  $region5: #{tile.8} parent=0 // pred_fallthru
    _
  %v4 = vld [vmem:[%s0] ss:$0 sm:$0xff]
  %5 = vst [vmem:[%s1] sm:$0xff] %v4
  %s6 = scalar_lea.vmem %s1, 8
  %7 = vst [vmem:[%s6] sm:$0xff] %v4
  %s8 = scalar_lea.vmem %s1, 16
  %9 = vst [vmem:[%s8] sm:$0xff] %v4
  %s10 = scalar_lea.vmem %s1, 24
  %11 = vst [vmem:[%s10] sm:$0xff] %v4
  %s12 = scalar_lea.vmem %s1, 32
  %13 = vst [vmem:[%s12] sm:$0xff] %v4
  %s14 = scalar_lea.vmem %s1, 40
  %15 = vst [vmem:[%s14] sm:$0xff] %v4
  %s16 = scalar_lea.vmem %s1, 48
  %17 = vst [vmem:[%s16] sm:$0xff] %v4
  %s18 = scalar_lea.vmem %s1, 56
  %19 = vst [vmem:[%s18] sm:$0xff] %v4
  %s20 = scalar_lea.vmem %s1, 64
  %21 = vst [vmem:[%s20] sm:$0xff] %v4
  %s22 = scalar_lea.vmem %s1, 72
  %23 = vst [vmem:[%s22] sm:$0xff] %v4
  %s24 = scalar_lea.vmem %s1, 80
  %25 = vst [vmem:[%s24] sm:$0xff] %v4
  %s26 = scalar_lea.vmem %s1, 88
  %27 = vst [vmem:[%s26] sm:$0xff] %v4
  %s28 = scalar_lea.vmem %s1, 96
  %29 = vst [vmem:[%s28] sm:$0xff] %v4

// kernel: tile.9
$region0: #{tile.9}
  %s0 = inlined_call_operand.vmem [shape: f32[100,6], index: 0, kind: input, shape index: {}]
  %s1 = inlined_call_operand.vmem [shape: f32[1,600], index: 1, kind: output, shape index: {}]
  $region1: #{tile.9} parent=0
    #allocation0 [shape = 'u8[20480]{0}', space=vmem, size = 0x5000, scoped, tag = 'scoped mem for output reshape']
    %v2 = vld [vmem:[%s0] sm:$0x1]
    %s3 = scalar_lea.vmem %s0, 63
    %v4 = vld [vmem:[%s3] sm:$0x2]
    %vm5 = vcmask 1041409
    %v6 = vsel %vm5, %v4, %v2
    %vm7 = vcmask 48128
    %8 = vst.msk [vmem:[#allocation0] ss:$24 sm:$0x3] %vm7, %v6
    %s9 = scalar_lea.vmem %s0, 85
    %v10 = vld [vmem:[%s9] sm:$0x1]
    %s11 = scalar_lea.vmem %s0, 20
    %v12 = vld [vmem:[%s11] sm:$0x2]
    %vm13 = vcmask 1041409
    %v14 = vsel %vm13, %v12, %v10
    %s15 = scalar_lea.vmem %s0, 21
    %v16 = vld [vmem:[%s15] sm:$0x1]
    %s17 = scalar_lea.vmem %s0, 84
    %v18 = vld [vmem:[%s17] sm:$0x2]
    %vm19 = vcmask 1041409
    %v20 = vsel %vm19, %v18, %v16
    %vm21 = vcmask 15360
    %v22 = vsel %vm21, %v20, %v14
    %23 = vrot.lane.b32.xlu0 %v22, 126
    %v24 = vpop.permute.xlu0 %23
    %vm25 = vcmask 31744
    %s26 = scalar_lea.vmem [#allocation0], 32
    %27 = vst.msk [vmem:[%s26] ss:$-24 sm:$0x3] %vm25, %v24
    %vm28 = vcmask 1048560
    %29 = vst.msk [vmem:[#allocation0] ss:$24 sm:$0x3] %vm28, %v24
    %s30 = scalar_lea.vmem %s0, 42
    %v31 = vld [vmem:[%s30] sm:$0x1]
    %s32 = scalar_lea.vmem %s0, 42
    %v33 = vld [vmem:[%s32] sm:$0x1]
    %vm34 = vcmask 31744
    %v35 = vsel %vm34, %v33, %v31
    %36 = vrot.lane.b32.xlu0 %v35, 124
    %v37 = vpop.permute.xlu0 %36
    %vm38 = vcmask 15360
    %s39 = scalar_lea.vmem [#allocation0], 16
    %40 = vst.msk [vmem:[%s39] sm:$0x1] %vm38, %v37
    %vm41 = vcmask 1048544
    %s42 = scalar_lea.vmem [#allocation0], 8
    %43 = vst.msk [vmem:[%s42] sm:$0x1] %vm41, %v37
    %s44 = scalar_lea.vmem %s0, 63
    %v45 = vld [vmem:[%s44] sm:$0x1]
    %46 = vrot.lane.b32.xlu0 %v45, 122
    %v47 = vpop.permute.xlu0 %46
    %vm48 = vcmask 1048528
    %s49 = scalar_lea.vmem [#allocation0], 16
    %50 = vst.msk [vmem:[%s49] sm:$0x1] %vm48, %v47
    %s51 = scalar_lea.vmem %s0, 20
    %v52 = vld [vmem:[%s51] sm:$0x1]
    %s53 = scalar_lea.vmem %s0, 83
    %v54 = vld [vmem:[%s53] sm:$0x2]
    %vm55 = vcmask 1041409
    %v56 = vsel %vm55, %v54, %v52
    %57 = vrot.lane.b32.xlu0 %v56, 120
    %v58 = vpop.permute.xlu0 %57
    %vm59 = vcmask 1032128
    %60 = vst.msk [vmem:[#allocation0] ss:$24 sm:$0x3] %vm59, %v58
    %s61 = scalar_lea.vmem %s0, 41
    %v62 = vld [vmem:[%s61] sm:$0x1]
    %63 = vrot.lane.b32.xlu0 %v62, 118
    %v64 = vpop.permute.xlu0 %63
    %vm65 = vcmask 1015728
    %s66 = scalar_lea.vmem [#allocation0], 8
    %67 = vst.msk [vmem:[%s66] sm:$0x1] %vm65, %v64
    %s68 = scalar_lea.vmem %s0, 62
    %v69 = vld [vmem:[%s68] sm:$0x1]
    %70 = vrot.lane.b32.xlu0 %v69, 116
    %v71 = vpop.permute.xlu0 %70
    %vm72 = vcmask 999328
    %s73 = scalar_lea.vmem [#allocation0], 16
    %74 = vst.msk [vmem:[%s73] sm:$0x1] %vm72, %v71
    %s75 = scalar_lea.vmem %s0, 19
    %v76 = vld [vmem:[%s75] sm:$0x1]
    %s77 = scalar_lea.vmem %s0, 82
    %v78 = vld [vmem:[%s77] sm:$0x2]
    %vm79 = vcmask 1041409
    %v80 = vsel %vm79, %v78, %v76
    %81 = vrot.lane.b32.xlu0 %v80, 114
    %v82 = vpop.permute.xlu0 %81
    %vm83 = vcmask 982928
    %84 = vst.msk [vmem:[#allocation0] ss:$24 sm:$0x3] %vm83, %v82
    %s85 = scalar_lea.vmem %s0, 40
    %v86 = vld [vmem:[%s85] sm:$0x1]
    %87 = vrot.lane.b32.xlu0 %v86, 112
    %v88 = vpop.permute.xlu0 %87
    %vm89 = vcmask 966528
    %s90 = scalar_lea.vmem [#allocation0], 8
    %91 = vst.msk [vmem:[%s90] sm:$0x1] %vm89, %v88
    %s92 = scalar_lea.vmem %s0, 61
    %v93 = vld [vmem:[%s92] sm:$0x1]
    %94 = vrot.lane.b32.xlu0 %v93, 110
    %v95 = vpop.permute.xlu0 %94
    %vm96 = vcmask 950128
    %s97 = scalar_lea.vmem [#allocation0], 16
    %98 = vst.msk [vmem:[%s97] sm:$0x1] %vm96, %v95
    %s99 = scalar_lea.vmem %s0, 18
    %v100 = vld [vmem:[%s99] sm:$0x1]
    %s101 = scalar_lea.vmem %s0, 81
    %v102 = vld [vmem:[%s101] sm:$0x2]
    %vm103 = vcmask 1041409
    %v104 = vsel %vm103, %v102, %v100
    %105 = vrot.lane.b32.xlu0 %v104, 108
    %v106 = vpop.permute.xlu0 %105
    %vm107 = vcmask 933728
    %108 = vst.msk [vmem:[#allocation0] ss:$24 sm:$0x3] %vm107, %v106
    %s109 = scalar_lea.vmem %s0, 39
    %v110 = vld [vmem:[%s109] sm:$0x1]
    %111 = vrot.lane.b32.xlu0 %v110, 106
    %v112 = vpop.permute.xlu0 %111
    %vm113 = vcmask 917328
    %s114 = scalar_lea.vmem [#allocation0], 8
    %115 = vst.msk [vmem:[%s114] sm:$0x1] %vm113, %v112
    %s116 = scalar_lea.vmem %s0, 60
    %v117 = vld [vmem:[%s116] sm:$0x1]
    %118 = vrot.lane.b32.xlu0 %v117, 104
    %v119 = vpop.permute.xlu0 %118
    %vm120 = vcmask 900928
    %s121 = scalar_lea.vmem [#allocation0], 16
    %122 = vst.msk [vmem:[%s121] sm:$0x1] %vm120, %v119
    %s123 = scalar_lea.vmem %s0, 17
    %v124 = vld [vmem:[%s123] sm:$0x1]
    %s125 = scalar_lea.vmem %s0, 80
    %v126 = vld [vmem:[%s125] sm:$0x2]
    %vm127 = vcmask 1041409
    %v128 = vsel %vm127, %v126, %v124
    %129 = vrot.lane.b32.xlu0 %v128, 102
    %v130 = vpop.permute.xlu0 %129
    %vm131 = vcmask 884528
    %132 = vst.msk [vmem:[#allocation0] ss:$24 sm:$0x3] %vm131, %v130
    %s133 = scalar_lea.vmem %s0, 38
    %v134 = vld [vmem:[%s133] sm:$0x1]
    %135 = vrot.lane.b32.xlu0 %v134, 100
    %v136 = vpop.permute.xlu0 %135
    %vm137 = vcmask 868128
    %s138 = scalar_lea.vmem [#allocation0], 8
    %139 = vst.msk [vmem:[%s138] sm:$0x1] %vm137, %v136
    %s140 = scalar_lea.vmem %s0, 59
    %v141 = vld [vmem:[%s140] sm:$0x1]
    %142 = vrot.lane.b32.xlu0 %v141, 98
    %v143 = vpop.permute.xlu0 %142
    %vm144 = vcmask 851728
    %s145 = scalar_lea.vmem [#allocation0], 16
    %146 = vst.msk [vmem:[%s145] sm:$0x1] %vm144, %v143
    %s147 = scalar_lea.vmem %s0, 16
    %v148 = vld [vmem:[%s147] sm:$0x1]
    %s149 = scalar_lea.vmem %s0, 79
    %v150 = vld [vmem:[%s149] sm:$0x2]
    %vm151 = vcmask 1041409
    %v152 = vsel %vm151, %v150, %v148
    %153 = vrot.lane.b32.xlu0 %v152, 96
    %v154 = vpop.permute.xlu0 %153
    %vm155 = vcmask 835328
    %156 = vst.msk [vmem:[#allocation0] ss:$24 sm:$0x3] %vm155, %v154
    %s157 = scalar_lea.vmem %s0, 37
    %v158 = vld [vmem:[%s157] sm:$0x1]
    %159 = vrot.lane.b32.xlu0 %v158, 94
    %v160 = vpop.permute.xlu0 %159
    %vm161 = vcmask 818928
    %s162 = scalar_lea.vmem [#allocation0], 8
    %163 = vst.msk [vmem:[%s162] sm:$0x1] %vm161, %v160
    %s164 = scalar_lea.vmem %s0, 58
    %v165 = vld [vmem:[%s164] sm:$0x1]
    %166 = vrot.lane.b32.xlu0 %v165, 92
    %v167 = vpop.permute.xlu0 %166
    %vm168 = vcmask 802528
    %s169 = scalar_lea.vmem [#allocation0], 16
    %170 = vst.msk [vmem:[%s169] sm:$0x1] %vm168, %v167
    %s171 = scalar_lea.vmem %s0, 15
    %v172 = vld [vmem:[%s171] sm:$0x1]
    %s173 = scalar_lea.vmem %s0, 78
    %v174 = vld [vmem:[%s173] sm:$0x2]
    %vm175 = vcmask 1041409
    %v176 = vsel %vm175, %v174, %v172
    %177 = vrot.lane.b32.xlu0 %v176, 90
    %v178 = vpop.permute.xlu0 %177
    %vm179 = vcmask 786128
    %180 = vst.msk [vmem:[#allocation0] ss:$24 sm:$0x3] %vm179, %v178
    %s181 = scalar_lea.vmem %s0, 36
    %v182 = vld [vmem:[%s181] sm:$0x1]
    %183 = vrot.lane.b32.xlu0 %v182, 88
    %v184 = vpop.permute.xlu0 %183
    %vm185 = vcmask 769728
    %s186 = scalar_lea.vmem [#allocation0], 8
    %187 = vst.msk [vmem:[%s186] sm:$0x1] %vm185, %v184
    %s188 = scalar_lea.vmem %s0, 57
    %v189 = vld [vmem:[%s188] sm:$0x1]
    %190 = vrot.lane.b32.xlu0 %v189, 86
    %v191 = vpop.permute.xlu0 %190
    %vm192 = vcmask 753328
    %s193 = scalar_lea.vmem [#allocation0], 16
    %194 = vst.msk [vmem:[%s193] sm:$0x1] %vm192, %v191
    %s195 = scalar_lea.vmem %s0, 14
    %v196 = vld [vmem:[%s195] sm:$0x1]
    %s197 = scalar_lea.vmem %s0, 77
    %v198 = vld [vmem:[%s197] sm:$0x2]
    %vm199 = vcmask 1041409
    %v200 = vsel %vm199, %v198, %v196
    %201 = vrot.lane.b32.xlu0 %v200, 84
    %v202 = vpop.permute.xlu0 %201
    %vm203 = vcmask 736928
    %204 = vst.msk [vmem:[#allocation0] ss:$24 sm:$0x3] %vm203, %v202
    %s205 = scalar_lea.vmem %s0, 99
    %v206 = vld [vmem:[%s205] sm:$0x1]
    %s207 = scalar_lea.vmem %s0, 34
    %v208 = vld [vmem:[%s207] sm:$0x2]
    %vm209 = vcmask 1041409
    %v210 = vsel %vm209, %v208, %v206
    %211 = vrot.lane.b32.xlu0 %v210, 82
    %v212 = vpop.permute.xlu0 %211
    %vm213 = vcmask 720528
    %s214 = scalar_lea.vmem [#allocation0], 32
    %215 = vst.msk [vmem:[%s214] ss:$-24 sm:$0x3] %vm213, %v212
    %s216 = scalar_lea.vmem %s0, 56
    %v217 = vld [vmem:[%s216] sm:$0x1]
    %218 = vrot.lane.b32.xlu0 %v217, 80
    %v219 = vpop.permute.xlu0 %218
    %vm220 = vcmask 704128
    %s221 = scalar_lea.vmem [#allocation0], 16
    %222 = vst.msk [vmem:[%s221] sm:$0x1] %vm220, %v219
    %s223 = scalar_lea.vmem %s0, 13
    %v224 = vld [vmem:[%s223] sm:$0x1]
    %s225 = scalar_lea.vmem %s0, 76
    %v226 = vld [vmem:[%s225] sm:$0x2]
    %vm227 = vcmask 1041409
    %v228 = vsel %vm227, %v226, %v224
    %229 = vrot.lane.b32.xlu0 %v228, 78
    %v230 = vpop.permute.xlu0 %229
    %vm231 = vcmask 687728
    %232 = vst.msk [vmem:[#allocation0] ss:$24 sm:$0x3] %vm231, %v230
    %s233 = scalar_lea.vmem %s0, 98
    %v234 = vld [vmem:[%s233] sm:$0x1]
    %s235 = scalar_lea.vmem %s0, 33
    %v236 = vld [vmem:[%s235] sm:$0x2]
    %vm237 = vcmask 1041409
    %v238 = vsel %vm237, %v236, %v234
    %239 = vrot.lane.b32.xlu0 %v238, 76
    %v240 = vpop.permute.xlu0 %239
    %vm241 = vcmask 671328
    %s242 = scalar_lea.vmem [#allocation0], 32
    %243 = vst.msk [vmem:[%s242] ss:$-24 sm:$0x3] %vm241, %v240
    %s244 = scalar_lea.vmem %s0, 55
    %v245 = vld [vmem:[%s244] sm:$0x1]
    %246 = vrot.lane.b32.xlu0 %v245, 74
    %v247 = vpop.permute.xlu0 %246
    %vm248 = vcmask 654928
    %s249 = scalar_lea.vmem [#allocation0], 16
    %250 = vst.msk [vmem:[%s249] sm:$0x1] %vm248, %v247
    %s251 = scalar_lea.vmem %s0, 12
    %v252 = vld [vmem:[%s251] sm:$0x1]
    %s253 = scalar_lea.vmem %s0, 75
    %v254 = vld [vmem:[%s253] sm:$0x2]
    %vm255 = vcmask 1041409
    %v256 = vsel %vm255, %v254, %v252
    %257 = vrot.lane.b32.xlu0 %v256, 72
    %v258 = vpop.permute.xlu0 %257
    %vm259 = vcmask 638528
    %260 = vst.msk [vmem:[#allocation0] ss:$24 sm:$0x3] %vm259, %v258
    %s261 = scalar_lea.vmem %s0, 97
    %v262 = vld [vmem:[%s261] sm:$0x1]
    %s263 = scalar_lea.vmem %s0, 32
    %v264 = vld [vmem:[%s263] sm:$0x2]
    %vm265 = vcmask 1041409
    %v266 = vsel %vm265, %v264, %v262
    %267 = vrot.lane.b32.xlu0 %v266, 70
    %v268 = vpop.permute.xlu0 %267
    %vm269 = vcmask 622128
    %s270 = scalar_lea.vmem [#allocation0], 32
    %271 = vst.msk [vmem:[%s270] ss:$-24 sm:$0x3] %vm269, %v268
    %s272 = scalar_lea.vmem %s0, 54
    %v273 = vld [vmem:[%s272] sm:$0x1]
    %274 = vrot.lane.b32.xlu0 %v273, 68
    %v275 = vpop.permute.xlu0 %274
    %vm276 = vcmask 605728
    %s277 = scalar_lea.vmem [#allocation0], 16
    %278 = vst.msk [vmem:[%s277] sm:$0x1] %vm276, %v275
    %s279 = scalar_lea.vmem %s0, 11
    %v280 = vld [vmem:[%s279] sm:$0x1]
    %s281 = scalar_lea.vmem %s0, 74
    %v282 = vld [vmem:[%s281] sm:$0x2]
    %vm283 = vcmask 1041409
    %v284 = vsel %vm283, %v282, %v280
    %285 = vrot.lane.b32.xlu0 %v284, 66
    %v286 = vpop.permute.xlu0 %285
    %vm287 = vcmask 589328
    %288 = vst.msk [vmem:[#allocation0] ss:$24 sm:$0x3] %vm287, %v286
    %s289 = scalar_lea.vmem %s0, 96
    %v290 = vld [vmem:[%s289] sm:$0x1]
    %s291 = scalar_lea.vmem %s0, 31
    %v292 = vld [vmem:[%s291] sm:$0x2]
    %vm293 = vcmask 1041409
    %v294 = vsel %vm293, %v292, %v290
    %295 = vrot.lane.b32.xlu0 %v294, 64
    %v296 = vpop.permute.xlu0 %295
    %vm297 = vcmask 572928
    %s298 = scalar_lea.vmem [#allocation0], 32
    %299 = vst.msk [vmem:[%s298] ss:$-24 sm:$0x3] %vm297, %v296
    %s300 = scalar_lea.vmem %s0, 53
    %v301 = vld [vmem:[%s300] sm:$0x1]
    %302 = vrot.lane.b32.xlu0 %v301, 62
    %v303 = vpop.permute.xlu0 %302
    %vm304 = vcmask 556528
    %s305 = scalar_lea.vmem [#allocation0], 16
    %306 = vst.msk [vmem:[%s305] sm:$0x1] %vm304, %v303
    %s307 = scalar_lea.vmem %s0, 10
    %v308 = vld [vmem:[%s307] sm:$0x1]
    %s309 = scalar_lea.vmem %s0, 73
    %v310 = vld [vmem:[%s309] sm:$0x2]
    %vm311 = vcmask 1041409
    %v312 = vsel %vm311, %v310, %v308
    %313 = vrot.lane.b32.xlu0 %v312, 60
    %v314 = vpop.permute.xlu0 %313
    %vm315 = vcmask 540128
    %316 = vst.msk [vmem:[#allocation0] ss:$24 sm:$0x3] %vm315, %v314
    %s317 = scalar_lea.vmem %s0, 95
    %v318 = vld [vmem:[%s317] sm:$0x1]
    %s319 = scalar_lea.vmem %s0, 30
    %v320 = vld [vmem:[%s319] sm:$0x2]
    %vm321 = vcmask 1041409
    %v322 = vsel %vm321, %v320, %v318
    %323 = vrot.lane.b32.xlu0 %v322, 58
    %v324 = vpop.permute.xlu0 %323
    %vm325 = vcmask 523728
    %s326 = scalar_lea.vmem [#allocation0], 32
    %327 = vst.msk [vmem:[%s326] ss:$-24 sm:$0x3] %vm325, %v324
    %s328 = scalar_lea.vmem %s0, 52
    %v329 = vld [vmem:[%s328] sm:$0x1]
    %330 = vrot.lane.b32.xlu0 %v329, 56
    %v331 = vpop.permute.xlu0 %330
    %vm332 = vcmask 507328
    %s333 = scalar_lea.vmem [#allocation0], 16
    %334 = vst.msk [vmem:[%s333] sm:$0x1] %vm332, %v331
    %s335 = scalar_lea.vmem %s0, 9
    %v336 = vld [vmem:[%s335] sm:$0x1]
    %s337 = scalar_lea.vmem %s0, 72
    %v338 = vld [vmem:[%s337] sm:$0x2]
    %vm339 = vcmask 1041409
    %v340 = vsel %vm339, %v338, %v336
    %341 = vrot.lane.b32.xlu0 %v340, 54
    %v342 = vpop.permute.xlu0 %341
    %vm343 = vcmask 490928
    %344 = vst.msk [vmem:[#allocation0] ss:$24 sm:$0x3] %vm343, %v342
    %s345 = scalar_lea.vmem %s0, 94
    %v346 = vld [vmem:[%s345] sm:$0x1]
    %s347 = scalar_lea.vmem %s0, 29
    %v348 = vld [vmem:[%s347] sm:$0x2]
    %vm349 = vcmask 1041409
    %v350 = vsel %vm349, %v348, %v346
    %351 = vrot.lane.b32.xlu0 %v350, 52
    %v352 = vpop.permute.xlu0 %351
    %vm353 = vcmask 474528
    %s354 = scalar_lea.vmem [#allocation0], 32
    %355 = vst.msk [vmem:[%s354] ss:$-24 sm:$0x3] %vm353, %v352
    %s356 = scalar_lea.vmem %s0, 51
    %v357 = vld [vmem:[%s356] sm:$0x1]
    %358 = vrot.lane.b32.xlu0 %v357, 50
    %v359 = vpop.permute.xlu0 %358
    %vm360 = vcmask 458128
    %s361 = scalar_lea.vmem [#allocation0], 16
    %362 = vst.msk [vmem:[%s361] sm:$0x1] %vm360, %v359
    %s363 = scalar_lea.vmem %s0, 8
    %v364 = vld [vmem:[%s363] sm:$0x1]
    %s365 = scalar_lea.vmem %s0, 71
    %v366 = vld [vmem:[%s365] sm:$0x2]
    %vm367 = vcmask 1041409
    %v368 = vsel %vm367, %v366, %v364
    %369 = vrot.lane.b32.xlu0 %v368, 48
    %v370 = vpop.permute.xlu0 %369
    %vm371 = vcmask 441728
    %372 = vst.msk [vmem:[#allocation0] ss:$24 sm:$0x3] %vm371, %v370
    %s373 = scalar_lea.vmem %s0, 93
    %v374 = vld [vmem:[%s373] sm:$0x1]
    %s375 = scalar_lea.vmem %s0, 28
    %v376 = vld [vmem:[%s375] sm:$0x2]
    %vm377 = vcmask 1041409
    %v378 = vsel %vm377, %v376, %v374
    %379 = vrot.lane.b32.xlu0 %v378, 46
    %v380 = vpop.permute.xlu0 %379
    %vm381 = vcmask 425328
    %s382 = scalar_lea.vmem [#allocation0], 32
    %383 = vst.msk [vmem:[%s382] ss:$-24 sm:$0x3] %vm381, %v380
    %s384 = scalar_lea.vmem %s0, 50
    %v385 = vld [vmem:[%s384] sm:$0x1]
    %386 = vrot.lane.b32.xlu0 %v385, 44
    %v387 = vpop.permute.xlu0 %386
    %vm388 = vcmask 408928
    %s389 = scalar_lea.vmem [#allocation0], 16
    %390 = vst.msk [vmem:[%s389] sm:$0x1] %vm388, %v387
    %s391 = scalar_lea.vmem %s0, 7
    %v392 = vld [vmem:[%s391] sm:$0x1]
    %s393 = scalar_lea.vmem %s0, 70
    %v394 = vld [vmem:[%s393] sm:$0x2]
    %vm395 = vcmask 1041409
    %v396 = vsel %vm395, %v394, %v392
    %397 = vrot.lane.b32.xlu0 %v396, 42
    %v398 = vpop.permute.xlu0 %397
    %vm399 = vcmask 392528
    %400 = vst.msk [vmem:[#allocation0] ss:$24 sm:$0x3] %vm399, %v398
    %s401 = scalar_lea.vmem %s0, 92
    %v402 = vld [vmem:[%s401] sm:$0x1]
    %s403 = scalar_lea.vmem %s0, 27
    %v404 = vld [vmem:[%s403] sm:$0x2]
    %vm405 = vcmask 1041409
    %v406 = vsel %vm405, %v404, %v402
    %407 = vrot.lane.b32.xlu0 %v406, 40
    %v408 = vpop.permute.xlu0 %407
    %vm409 = vcmask 376128
    %s410 = scalar_lea.vmem [#allocation0], 32
    %411 = vst.msk [vmem:[%s410] ss:$-24 sm:$0x3] %vm409, %v408
    %s412 = scalar_lea.vmem %s0, 49
    %v413 = vld [vmem:[%s412] sm:$0x1]
    %414 = vrot.lane.b32.xlu0 %v413, 38
    %v415 = vpop.permute.xlu0 %414
    %vm416 = vcmask 359728
    %s417 = scalar_lea.vmem [#allocation0], 16
    %418 = vst.msk [vmem:[%s417] sm:$0x1] %vm416, %v415
    %s419 = scalar_lea.vmem %s0, 6
    %v420 = vld [vmem:[%s419] sm:$0x1]
    %s421 = scalar_lea.vmem %s0, 69
    %v422 = vld [vmem:[%s421] sm:$0x2]
    %vm423 = vcmask 1041409
    %v424 = vsel %vm423, %v422, %v420
    %425 = vrot.lane.b32.xlu0 %v424, 36
    %v426 = vpop.permute.xlu0 %425
    %vm427 = vcmask 343328
    %428 = vst.msk [vmem:[#allocation0] ss:$24 sm:$0x3] %vm427, %v426
    %s429 = scalar_lea.vmem %s0, 91
    %v430 = vld [vmem:[%s429] sm:$0x1]
    %s431 = scalar_lea.vmem %s0, 26
    %v432 = vld [vmem:[%s431] sm:$0x2]
    %vm433 = vcmask 1041409
    %v434 = vsel %vm433, %v432, %v430
    %435 = vrot.lane.b32.xlu0 %v434, 34
    %v436 = vpop.permute.xlu0 %435
    %vm437 = vcmask 326928
    %s438 = scalar_lea.vmem [#allocation0], 32
    %439 = vst.msk [vmem:[%s438] ss:$-24 sm:$0x3] %vm437, %v436
    %s440 = scalar_lea.vmem %s0, 48
    %v441 = vld [vmem:[%s440] sm:$0x1]
    %442 = vrot.lane.b32.xlu0 %v441, 32
    %v443 = vpop.permute.xlu0 %442
    %vm444 = vcmask 310528
    %s445 = scalar_lea.vmem [#allocation0], 16
    %446 = vst.msk [vmem:[%s445] sm:$0x1] %vm444, %v443
    %s447 = scalar_lea.vmem %s0, 5
    %v448 = vld [vmem:[%s447] sm:$0x1]
    %s449 = scalar_lea.vmem %s0, 68
    %v450 = vld [vmem:[%s449] sm:$0x2]
    %vm451 = vcmask 1041409
    %v452 = vsel %vm451, %v450, %v448
    %453 = vrot.lane.b32.xlu0 %v452, 30
    %v454 = vpop.permute.xlu0 %453
    %vm455 = vcmask 294128
    %456 = vst.msk [vmem:[#allocation0] ss:$24 sm:$0x3] %vm455, %v454
    %s457 = scalar_lea.vmem %s0, 90
    %v458 = vld [vmem:[%s457] sm:$0x1]
    %s459 = scalar_lea.vmem %s0, 25
    %v460 = vld [vmem:[%s459] sm:$0x2]
    %vm461 = vcmask 1041409
    %v462 = vsel %vm461, %v460, %v458
    %463 = vrot.lane.b32.xlu0 %v462, 28
    %v464 = vpop.permute.xlu0 %463
    %vm465 = vcmask 277728
    %s466 = scalar_lea.vmem [#allocation0], 32
    %467 = vst.msk [vmem:[%s466] ss:$-24 sm:$0x3] %vm465, %v464
    %s468 = scalar_lea.vmem %s0, 47
    %v469 = vld [vmem:[%s468] sm:$0x1]
    %470 = vrot.lane.b32.xlu0 %v469, 26
    %v471 = vpop.permute.xlu0 %470
    %vm472 = vcmask 261328
    %s473 = scalar_lea.vmem [#allocation0], 16
    %474 = vst.msk [vmem:[%s473] sm:$0x1] %vm472, %v471
    %s475 = scalar_lea.vmem %s0, 4
    %v476 = vld [vmem:[%s475] sm:$0x1]
    %s477 = scalar_lea.vmem %s0, 67
    %v478 = vld [vmem:[%s477] sm:$0x2]
    %vm479 = vcmask 1041409
    %v480 = vsel %vm479, %v478, %v476
    %481 = vrot.lane.b32.xlu0 %v480, 24
    %v482 = vpop.permute.xlu0 %481
    %vm483 = vcmask 244928
    %484 = vst.msk [vmem:[#allocation0] ss:$24 sm:$0x3] %vm483, %v482
    %s485 = scalar_lea.vmem %s0, 89
    %v486 = vld [vmem:[%s485] sm:$0x1]
    %s487 = scalar_lea.vmem %s0, 24
    %v488 = vld [vmem:[%s487] sm:$0x2]
    %vm489 = vcmask 1041409
    %v490 = vsel %vm489, %v488, %v486
    %491 = vrot.lane.b32.xlu0 %v490, 22
    %v492 = vpop.permute.xlu0 %491
    %vm493 = vcmask 228528
    %s494 = scalar_lea.vmem [#allocation0], 32
    %495 = vst.msk [vmem:[%s494] ss:$-24 sm:$0x3] %vm493, %v492
    %s496 = scalar_lea.vmem %s0, 46
    %v497 = vld [vmem:[%s496] sm:$0x1]
    %498 = vrot.lane.b32.xlu0 %v497, 20
    %v499 = vpop.permute.xlu0 %498
    %vm500 = vcmask 212128
    %s501 = scalar_lea.vmem [#allocation0], 16
    %502 = vst.msk [vmem:[%s501] sm:$0x1] %vm500, %v499
    %s503 = scalar_lea.vmem %s0, 3
    %v504 = vld [vmem:[%s503] sm:$0x1]
    %s505 = scalar_lea.vmem %s0, 66
    %v506 = vld [vmem:[%s505] sm:$0x2]
    %vm507 = vcmask 1041409
    %v508 = vsel %vm507, %v506, %v504
    %509 = vrot.lane.b32.xlu0 %v508, 18
    %v510 = vpop.permute.xlu0 %509
    %vm511 = vcmask 195728
    %512 = vst.msk [vmem:[#allocation0] ss:$24 sm:$0x3] %vm511, %v510
    %s513 = scalar_lea.vmem %s0, 88
    %v514 = vld [vmem:[%s513] sm:$0x1]
    %s515 = scalar_lea.vmem %s0, 23
    %v516 = vld [vmem:[%s515] sm:$0x2]
    %vm517 = vcmask 1041409
    %v518 = vsel %vm517, %v516, %v514
    %519 = vrot.lane.b32.xlu0 %v518, 16
    %v520 = vpop.permute.xlu0 %519
    %vm521 = vcmask 179328
    %s522 = scalar_lea.vmem [#allocation0], 32
    %523 = vst.msk [vmem:[%s522] ss:$-24 sm:$0x3] %vm521, %v520
    %s524 = scalar_lea.vmem %s0, 45
    %v525 = vld [vmem:[%s524] sm:$0x1]
    %526 = vrot.lane.b32.xlu0 %v525, 14
    %v527 = vpop.permute.xlu0 %526
    %vm528 = vcmask 162928
    %s529 = scalar_lea.vmem [#allocation0], 16
    %530 = vst.msk [vmem:[%s529] sm:$0x1] %vm528, %v527
    %s531 = scalar_lea.vmem %s0, 2
    %v532 = vld [vmem:[%s531] sm:$0x1]
    %s533 = scalar_lea.vmem %s0, 65
    %v534 = vld [vmem:[%s533] sm:$0x2]
    %vm535 = vcmask 1041409
    %v536 = vsel %vm535, %v534, %v532
    %537 = vrot.lane.b32.xlu0 %v536, 12
    %v538 = vpop.permute.xlu0 %537
    %vm539 = vcmask 146528
    %540 = vst.msk [vmem:[#allocation0] ss:$24 sm:$0x3] %vm539, %v538
    %s541 = scalar_lea.vmem %s0, 87
    %v542 = vld [vmem:[%s541] sm:$0x1]
    %s543 = scalar_lea.vmem %s0, 22
    %v544 = vld [vmem:[%s543] sm:$0x2]
    %vm545 = vcmask 1041409
    %v546 = vsel %vm545, %v544, %v542
    %547 = vrot.lane.b32.xlu0 %v546, 10
    %v548 = vpop.permute.xlu0 %547
    %vm549 = vcmask 130128
    %s550 = scalar_lea.vmem [#allocation0], 32
    %551 = vst.msk [vmem:[%s550] ss:$-24 sm:$0x3] %vm549, %v548
    %s552 = scalar_lea.vmem %s0, 44
    %v553 = vld [vmem:[%s552] sm:$0x1]
    %554 = vrot.lane.b32.xlu0 %v553, 8
    %v555 = vpop.permute.xlu0 %554
    %vm556 = vcmask 113728
    %s557 = scalar_lea.vmem [#allocation0], 16
    %558 = vst.msk [vmem:[%s557] sm:$0x1] %vm556, %v555
    %s559 = scalar_lea.vmem %s0, 1
    %v560 = vld [vmem:[%s559] sm:$0x1]
    %s561 = scalar_lea.vmem %s0, 64
    %v562 = vld [vmem:[%s561] sm:$0x2]
    %vm563 = vcmask 1041409
    %v564 = vsel %vm563, %v562, %v560
    %565 = vrot.lane.b32.xlu0 %v564, 6
    %v566 = vpop.permute.xlu0 %565
    %vm567 = vcmask 97328
    %568 = vst.msk [vmem:[#allocation0] ss:$24 sm:$0x3] %vm567, %v566
    %s569 = scalar_lea.vmem %s0, 86
    %v570 = vld [vmem:[%s569] sm:$0x1]
    %s571 = scalar_lea.vmem %s0, 21
    %v572 = vld [vmem:[%s571] sm:$0x2]
    %vm573 = vcmask 1041409
    %v574 = vsel %vm573, %v572, %v570
    %575 = vrot.lane.b32.xlu0 %v574, 4
    %v576 = vpop.permute.xlu0 %575
    %vm577 = vcmask 80928
    %s578 = scalar_lea.vmem [#allocation0], 32
    %579 = vst.msk [vmem:[%s578] ss:$-24 sm:$0x3] %vm577, %v576
    %s580 = scalar_lea.vmem %s0, 43
    %v581 = vld [vmem:[%s580] sm:$0x1]
    %582 = vrot.lane.b32.xlu0 %v581, 2
    %v583 = vpop.permute.xlu0 %582
    %vm584 = vcmask 64528
    %s585 = scalar_lea.vmem [#allocation0], 16
    %586 = vst.msk [vmem:[%s585] sm:$0x1] %vm584, %v583
    %s588 = ssub.s32 2, 1
    %v589 = vld [vmem:[#allocation0] sm:%s588]
    %s591 = ssub.s32 2, 1
    %592 = vst [vmem:[%s1] sm:%s591] %v589
    %s593 = scalar_lea.vmem [#allocation0], 8
    %v594 = vld [vmem:[%s593] sm:%s588]
    %s596 = ssub.s32 2, 1
    %s597 = scalar_lea.vmem %s1, 1
    %598 = vst [vmem:[%s597] sm:%s596] %v594
    %s599 = scalar_lea.vmem [#allocation0], 16
    %v600 = vld [vmem:[%s599] sm:%s588]
    %s602 = ssub.s32 2, 1
    %s603 = scalar_lea.vmem %s1, 2
    %604 = vst [vmem:[%s603] sm:%s602] %v600
    %s605 = scalar_lea.vmem [#allocation0], 24
    %v606 = vld [vmem:[%s605] sm:%s588]
    %s608 = ssub.s32 2, 1
    %s609 = scalar_lea.vmem %s1, 3
    %610 = vst [vmem:[%s609] sm:%s608] %v606
    %s611 = scalar_lea.vmem [#allocation0], 32
    %v612 = vld [vmem:[%s611] sm:%s588]
    %s614 = ssub.s32 2, 1
    %s615 = scalar_lea.vmem %s1, 4
    %616 = vst [vmem:[%s615] sm:%s614] %v612

// kernel: cnn_forward.1
$region0: #{cnn_forward.1}
  #allocation0 [shape = 'u32[]', space=smem, size = 0x4, offset = 0x4, fixed_abs, tag = 'smem constant byte address 0x4 - core index']
  #allocation1 [shape = 'u32[72,128]{1,0:T(1,128)}', space=vmem, size = 0x9000, scoped, tag = 'internal scratch']
  %s0 = inlined_call_operand.vmem [shape: bf16[8,588], index: 0, kind: input, shape index: {}]
  %s1 = inlined_call_operand.vmem [shape: bf16[588,600], index: 1, kind: input, shape index: {}]
  %s2 = inlined_call_operand.vmem [shape: f32[1,600], index: 2, kind: input, shape index: {}]
  %s3 = inlined_call_operand.vmem [shape: bf16[600,16], index: 3, kind: input, shape index: {}]
  %s4 = inlined_call_operand.vmem [shape: f32[1,16], index: 4, kind: input, shape index: {}]
  %s5 = inlined_call_operand.vmem [shape: bf16[16,120], index: 5, kind: input, shape index: {}]
  %s6 = inlined_call_operand.vmem [shape: f32[1,120], index: 6, kind: input, shape index: {}]
  %s7 = inlined_call_operand.vmem [shape: bf16[120,84], index: 7, kind: input, shape index: {}]
  %s8 = inlined_call_operand.vmem [shape: f32[1,84], index: 8, kind: input, shape index: {}]
  %s9 = inlined_call_operand.vmem [shape: bf16[84,10], index: 9, kind: input, shape index: {}]
  %s10 = inlined_call_operand.vmem [shape: f32[1,10], index: 10, kind: input, shape index: {}]
  %s11 = inlined_call_operand.vmem [shape: f32[8,10], index: 11, kind: output, shape index: {}]
  %s12 = sld [smem:[#allocation0]]
  $region54: #{cnn_forward.1} parent=0
    _
  %s14 = ssub.s32 1, %s12
  %s15 = scalar_select 0, %s14, %s12
  // Predicated region
  $region2: #{cnn_forward.1} parent=0 // pred_check
    _
  $region3: #{cnn_forward.1} parent=0 // pred_check_branch
    %17 = sbr.rel (0) target = $region5
  $region4: #{cnn_forward.1} parent=0 // pred_region
    _
  $region5: #{cnn_forward.1} parent=0 // pred_fallthru
    _
  // Predicated region
  $region6: #{cnn_forward.1} parent=0 // pred_check
    _
  $region7: #{cnn_forward.1} parent=0 // pred_check_branch
    %19 = sbr.rel (0) target = $region9
  $region8: #{cnn_forward.1} parent=0 // pred_region
    _
  $region9: #{cnn_forward.1} parent=0 // pred_fallthru
    _
  // Predicated region
  $region10: #{cnn_forward.1} parent=0 // pred_check
    _
  $region11: #{cnn_forward.1} parent=0 // pred_check_branch
    %21 = sbr.rel (0) target = $region13
  $region12: #{cnn_forward.1} parent=0 // pred_region
    _
  $region13: #{cnn_forward.1} parent=0 // pred_fallthru
    _
  // Predicated region
  $region14: #{cnn_forward.1} parent=0 // pred_check
    _
  $region15: #{cnn_forward.1} parent=0 // pred_check_branch
    %23 = sbr.rel (0) target = $region17
  $region16: #{cnn_forward.1} parent=0 // pred_region
    _
  $region17: #{cnn_forward.1} parent=0 // pred_fallthru
    _
  // Predicated region
  $region18: #{cnn_forward.1} parent=0 // pred_check
    _
  $region19: #{cnn_forward.1} parent=0 // pred_check_branch
    %25 = sbr.rel (0) target = $region21
  $region20: #{cnn_forward.1} parent=0 // pred_region
    _
  $region21: #{cnn_forward.1} parent=0 // pred_fallthru
    _
  // Predicated region
  $region22: #{cnn_forward.1} parent=0 // pred_check
    _
  $region23: #{cnn_forward.1} parent=0 // pred_check_branch
    %27 = sbr.rel (0) target = $region25
  $region24: #{cnn_forward.1} parent=0 // pred_region
    _
  $region25: #{cnn_forward.1} parent=0 // pred_fallthru
    _
  // Predicated region
  $region26: #{cnn_forward.1} parent=0 // pred_check
    _
  $region27: #{cnn_forward.1} parent=0 // pred_check_branch
    %29 = sbr.rel (0) target = $region29
  $region28: #{cnn_forward.1} parent=0 // pred_region
    _
  $region29: #{cnn_forward.1} parent=0 // pred_fallthru
    _
  // Predicated region
  $region30: #{cnn_forward.1} parent=0 // pred_check
    _
  $region31: #{cnn_forward.1} parent=0 // pred_check_branch
    %31 = sbr.rel (0) target = $region33
  $region32: #{cnn_forward.1} parent=0 // pred_region
    _
  $region33: #{cnn_forward.1} parent=0 // pred_fallthru
    _
  // Predicated region
  $region34: #{cnn_forward.1} parent=0 // pred_check
    _
  $region35: #{cnn_forward.1} parent=0 // pred_check_branch
    %33 = sbr.rel (0) target = $region37
  $region36: #{cnn_forward.1} parent=0 // pred_region
    _
  $region37: #{cnn_forward.1} parent=0 // pred_fallthru
    _
  // Predicated region
  $region38: #{cnn_forward.1} parent=0 // pred_check
    _
  $region39: #{cnn_forward.1} parent=0 // pred_check_branch
    %35 = sbr.rel (0) target = $region41
  $region40: #{cnn_forward.1} parent=0 // pred_region
    _
  $region41: #{cnn_forward.1} parent=0 // pred_fallthru
    _
  // Predicated region
  $region42: #{cnn_forward.1} parent=0 // pred_check
    _
  $region43: #{cnn_forward.1} parent=0 // pred_check_branch
    %37 = sbr.rel (0) target = $region45
  $region44: #{cnn_forward.1} parent=0 // pred_region
    _
  $region45: #{cnn_forward.1} parent=0 // pred_fallthru
    _
  %v39 = vld [vmem:[%s0] sm:$0xff]
  %v40 = vld [vmem:[%s0 + $0x8] sm:$0xff]
  %v41 = vld [vmem:[%s0 + $0x10] sm:$0xf]
  %v42 = vld [vmem:[%s1] sm:$0xff]
  %v43 = vld [vmem:[%s1 + $0x8] sm:$0xff]
  %v44 = vld [vmem:[%s1 + $0x10] sm:$0xf]
  %v45 = vld [vmem:[%s1 + $0x14] sm:$0xff]
  %v46 = vld [vmem:[%s1 + $0x1c] sm:$0xff]
  %v47 = vld [vmem:[%s1 + $0x24] sm:$0xf]
  %v48 = vld [vmem:[%s1 + $0x28] sm:$0xff]
  %v49 = vld [vmem:[%s1 + $0x30] sm:$0xff]
  %v50 = vld [vmem:[%s1 + $0x38] sm:$0xf]
  %v51 = vld [vmem:[%s1 + $0x3c] sm:$0xff]
  %v52 = vld [vmem:[%s1 + $0x44] sm:$0xff]
  %v53 = vld [vmem:[%s1 + $0x4c] sm:$0xf]
  %v54 = vld [vmem:[%s1 + $0x50] sm:$0xff]
  %v55 = vld [vmem:[%s1 + $0x58] sm:$0xff]
  %v56 = vld [vmem:[%s1 + $0x60] sm:$0xf]
  %v57 = vld [vmem:[%s1 + $0x64] sm:$0xff]
  %v58 = vld [vmem:[%s1 + $0x6c] sm:$0xff]
  %v59 = vld [vmem:[%s1 + $0x74] sm:$0xf]
  %v60 = vld [vmem:[%s1 + $0x78] sm:$0xff]
  %v61 = vld [vmem:[%s1 + $0x80] sm:$0xff]
  %v62 = vld [vmem:[%s1 + $0x88] sm:$0xf]
  %v63 = vld [vmem:[%s1 + $0x8c] sm:$0xff]
  %v64 = vld [vmem:[%s1 + $0x94] sm:$0xff]
  %v65 = vld [vmem:[%s1 + $0x9c] sm:$0xf]
  %v66 = vld [vmem:[%s1 + $0xa0] sm:$0xff]
  %v67 = vld [vmem:[%s1 + $0xa8] sm:$0xff]
  %v68 = vld [vmem:[%s1 + $0xb0] sm:$0xf]
  %v69 = vld [vmem:[%s1 + $0xb4] sm:$0xff]
  %v70 = vld [vmem:[%s1 + $0xbc] sm:$0xff]
  %v71 = vld [vmem:[%s1 + $0xc4] sm:$0xf]
  %v72 = vld [vmem:[%s1 + $0xc8] sm:$0xff]
  %v73 = vld [vmem:[%s1 + $0xd0] sm:$0xff]
  %v74 = vld [vmem:[%s1 + $0xd8] sm:$0xf]
  %v75 = vld [vmem:[%s1 + $0xdc] sm:$0xff]
  %v76 = vld [vmem:[%s1 + $0xe4] sm:$0xff]
  %v77 = vld [vmem:[%s1 + $0xec] sm:$0xf]
  %v78 = vld [vmem:[%s1 + $0xf0] sm:$0xff]
  %v79 = vld [vmem:[%s1 + $0xf8] sm:$0xff]
  %v80 = vld [vmem:[%s1 + $0x100] sm:$0xf]
  %v81 = vld [vmem:[%s1 + $0x104] sm:$0xff]
  %v82 = vld [vmem:[%s1 + $0x10c] sm:$0xff]
  %v83 = vld [vmem:[%s1 + $0x114] sm:$0xf]
  %v84 = vld [vmem:[%s1 + $0x118] sm:$0xff]
  %v85 = vld [vmem:[%s1 + $0x120] sm:$0xff]
  %v86 = vld [vmem:[%s1 + $0x128] sm:$0xf]
  %v87 = vld [vmem:[%s1 + $0x12c] sm:$0xff]
  %v88 = vld [vmem:[%s1 + $0x134] sm:$0xff]
  %v89 = vld [vmem:[%s1 + $0x13c] sm:$0xf]
  %v90 = vld [vmem:[%s1 + $0x140] sm:$0xff]
  %v91 = vld [vmem:[%s1 + $0x148] sm:$0xff]
  %v92 = vld [vmem:[%s1 + $0x150] sm:$0xf]
  %v93 = vld [vmem:[%s1 + $0x154] sm:$0xff]
  %v94 = vld [vmem:[%s1 + $0x15c] sm:$0xff]
  %v95 = vld [vmem:[%s1 + $0x164] sm:$0xf]
  %v96 = vld [vmem:[%s1 + $0x168] sm:$0xff]
  %v97 = vld [vmem:[%s1 + $0x170] sm:$0xff]
  %v98 = vld [vmem:[%s1 + $0x178] sm:$0xf]
  %v99 = vld [vmem:[%s1 + $0x17c] sm:$0xff]
  %v100 = vld [vmem:[%s1 + $0x184] sm:$0xff]
  %v101 = vld [vmem:[%s1 + $0x18c] sm:$0xf]
  %v102 = vld [vmem:[%s1 + $0x190] sm:$0xff]
  %v103 = vld [vmem:[%s1 + $0x198] sm:$0xff]
  %v104 = vld [vmem:[%s1 + $0x1a0] sm:$0xf]
  %v105 = vld [vmem:[%s1 + $0x1a4] sm:$0xff]
  %v106 = vld [vmem:[%s1 + $0x1ac] sm:$0xff]
  %v107 = vld [vmem:[%s1 + $0x1b4] sm:$0xf]
  %v108 = vld [vmem:[%s1 + $0x1b8] sm:$0xff]
  %v109 = vld [vmem:[%s1 + $0x1c0] sm:$0xff]
  %v110 = vld [vmem:[%s1 + $0x1c8] sm:$0xf]
  %v111 = vld [vmem:[%s1 + $0x1cc] sm:$0xff]
  %v112 = vld [vmem:[%s1 + $0x1d4] sm:$0xff]
  %v113 = vld [vmem:[%s1 + $0x1dc] sm:$0xf]
  %v114 = vld [vmem:[%s1 + $0x1e0] sm:$0xff]
  %v115 = vld [vmem:[%s1 + $0x1e8] sm:$0xff]
  %v116 = vld [vmem:[%s1 + $0x1f0] sm:$0xf]
  %v117 = vld [vmem:[%s1 + $0x1f4] sm:$0xff]
  %v118 = vld [vmem:[%s1 + $0x1fc] sm:$0xff]
  %v119 = vld [vmem:[%s1 + $0x204] sm:$0xf]
  %v120 = vld [vmem:[%s1 + $0x208] sm:$0xff]
  %v121 = vld [vmem:[%s1 + $0x210] sm:$0xff]
  %v122 = vld [vmem:[%s1 + $0x218] sm:$0xf]
  %v123 = vld [vmem:[%s1 + $0x21c] sm:$0xff]
  %v124 = vld [vmem:[%s1 + $0x224] sm:$0xff]
  %v125 = vld [vmem:[%s1 + $0x22c] sm:$0xf]
  %v126 = vld [vmem:[%s1 + $0x230] sm:$0xff]
  %v127 = vld [vmem:[%s1 + $0x238] sm:$0xff]
  %v128 = vld [vmem:[%s1 + $0x240] sm:$0xf]
  %v129 = vld [vmem:[%s1 + $0x244] sm:$0xff]
  %v130 = vld [vmem:[%s1 + $0x24c] sm:$0xff]
  %v131 = vld [vmem:[%s1 + $0x254] sm:$0xf]
  %v132 = vld [vmem:[%s1 + $0x258] sm:$0xff]
  %v133 = vld [vmem:[%s1 + $0x260] sm:$0xff]
  %v134 = vld [vmem:[%s1 + $0x268] sm:$0xf]
  %v135 = vld [vmem:[%s1 + $0x26c] sm:$0xff]
  %v136 = vld [vmem:[%s1 + $0x274] sm:$0xff]
  %v137 = vld [vmem:[%s1 + $0x27c] sm:$0xf]
  %v138 = vld [vmem:[%s1 + $0x280] sm:$0xff]
  %v139 = vld [vmem:[%s1 + $0x288] sm:$0xff]
  %v140 = vld [vmem:[%s1 + $0x290] sm:$0xf]
  %v141 = vld [vmem:[%s1 + $0x294] sm:$0xff]
  %v142 = vld [vmem:[%s1 + $0x29c] sm:$0xff]
  %v143 = vld [vmem:[%s1 + $0x2a4] sm:$0xf]
  %v144 = vld [vmem:[%s1 + $0x2a8] sm:$0xff]
  %v145 = vld [vmem:[%s1 + $0x2b0] sm:$0xff]
  %v146 = vld [vmem:[%s1 + $0x2b8] sm:$0xf]
  %v147 = vld [vmem:[%s1 + $0x2bc] sm:$0xff]
  %v148 = vld [vmem:[%s1 + $0x2c4] sm:$0xff]
  %v149 = vld [vmem:[%s1 + $0x2cc] sm:$0xf]
  %v150 = vld [vmem:[%s1 + $0x2d0] sm:$0xff]
  %v151 = vld [vmem:[%s1 + $0x2d8] sm:$0xff]
  %v152 = vld [vmem:[%s1 + $0x2e0] sm:$0xf]
  %v153 = vld [vmem:[%s1 + $0x2e4] sm:$0xff]
  %v154 = vld [vmem:[%s1 + $0x2ec] sm:$0xff]
  %v155 = vld [vmem:[%s1 + $0x2f4] sm:$0xf]
  %v156 = vld [vmem:[%s1 + $0x2f8] sm:$0xff]
  %v157 = vld [vmem:[%s1 + $0x300] sm:$0xff]
  %v158 = vld [vmem:[%s1 + $0x308] sm:$0xf]
  %v159 = vld [vmem:[%s1 + $0x30c] sm:$0xff]
  %v160 = vld [vmem:[%s1 + $0x314] sm:$0xff]
  %v161 = vld [vmem:[%s1 + $0x31c] sm:$0xf]
  %v162 = vld [vmem:[%s1 + $0x320] sm:$0xff]
  %v163 = vld [vmem:[%s1 + $0x328] sm:$0xff]
  %v164 = vld [vmem:[%s1 + $0x330] sm:$0xf]
  %v165 = vld [vmem:[%s1 + $0x334] sm:$0xff]
  %v166 = vld [vmem:[%s1 + $0x33c] sm:$0xff]
  %v167 = vld [vmem:[%s1 + $0x344] sm:$0xf]
  %v168 = vld [vmem:[%s1 + $0x348] sm:$0xff]
  %v169 = vld [vmem:[%s1 + $0x350] sm:$0xff]
  %v170 = vld [vmem:[%s1 + $0x358] sm:$0xf]
  %v171 = vld [vmem:[%s1 + $0x35c] sm:$0xff]
  %v172 = vld [vmem:[%s1 + $0x364] sm:$0xff]
  %v173 = vld [vmem:[%s1 + $0x36c] sm:$0xf]
  %v174 = vld [vmem:[%s1 + $0x370] sm:$0xff]
  %v175 = vld [vmem:[%s1 + $0x378] sm:$0xff]
  %v176 = vld [vmem:[%s1 + $0x380] sm:$0xf]
  %v177 = vld [vmem:[%s1 + $0x384] sm:$0xff]
  %v178 = vld [vmem:[%s1 + $0x38c] sm:$0xff]
  %v179 = vld [vmem:[%s1 + $0x394] sm:$0xf]
  %v180 = vld [vmem:[%s1 + $0x398] sm:$0xff]
  %v181 = vld [vmem:[%s1 + $0x3a0] sm:$0xff]
  %v182 = vld [vmem:[%s1 + $0x3a8] sm:$0xf]
  %v183 = vld [vmem:[%s1 + $0x3ac] sm:$0xff]
  %v184 = vld [vmem:[%s1 + $0x3b4] sm:$0xff]
  %v185 = vld [vmem:[%s1 + $0x3bc] sm:$0xf]
  %v186 = vld [vmem:[%s1 + $0x3c0] sm:$0xff]
  %v187 = vld [vmem:[%s1 + $0x3c8] sm:$0xff]
  %v188 = vld [vmem:[%s1 + $0x3d0] sm:$0xf]
  %v189 = vld [vmem:[%s1 + $0x3d4] sm:$0xff]
  %v190 = vld [vmem:[%s1 + $0x3dc] sm:$0xff]
  %v191 = vld [vmem:[%s1 + $0x3e4] sm:$0xf]
  %v192 = vld [vmem:[%s1 + $0x3e8] sm:$0xff]
  %v193 = vld [vmem:[%s1 + $0x3f0] sm:$0xff]
  %v194 = vld [vmem:[%s1 + $0x3f8] sm:$0xf]
  %v195 = vld [vmem:[%s1 + $0x3fc] sm:$0xff]
  %v196 = vld [vmem:[%s1 + $0x404] sm:$0xff]
  %v197 = vld [vmem:[%s1 + $0x40c] sm:$0xf]
  %v198 = vld [vmem:[%s1 + $0x410] sm:$0xff]
  %v199 = vld [vmem:[%s1 + $0x418] sm:$0xff]
  %v200 = vld [vmem:[%s1 + $0x420] sm:$0xf]
  %v201 = vld [vmem:[%s1 + $0x424] sm:$0xff]
  %v202 = vld [vmem:[%s1 + $0x42c] sm:$0xff]
  %v203 = vld [vmem:[%s1 + $0x434] sm:$0xf]
  %v204 = vld [vmem:[%s1 + $0x438] sm:$0xff]
  %v205 = vld [vmem:[%s1 + $0x440] sm:$0xff]
  %v206 = vld [vmem:[%s1 + $0x448] sm:$0xf]
  %v207 = vld [vmem:[%s1 + $0x44c] sm:$0xff]
  %v208 = vld [vmem:[%s1 + $0x454] sm:$0xff]
  %v209 = vld [vmem:[%s1 + $0x45c] sm:$0xf]
  %v210 = vld [vmem:[%s1 + $0x460] sm:$0xff]
  %v211 = vld [vmem:[%s1 + $0x468] sm:$0xff]
  %v212 = vld [vmem:[%s1 + $0x470] sm:$0xf]
  %v213 = vld [vmem:[%s1 + $0x474] sm:$0xff]
  %v214 = vld [vmem:[%s1 + $0x47c] sm:$0xff]
  %v215 = vld [vmem:[%s1 + $0x484] sm:$0xf]
  %v216 = vld [vmem:[%s1 + $0x488] sm:$0xff]
  %v217 = vld [vmem:[%s1 + $0x490] sm:$0xff]
  %v218 = vld [vmem:[%s1 + $0x498] sm:$0xf]
  %v219 = vld [vmem:[%s1 + $0x49c] sm:$0xff]
  %v220 = vld [vmem:[%s1 + $0x4a4] sm:$0xff]
  %v221 = vld [vmem:[%s1 + $0x4ac] sm:$0xf]
  %v222 = vld [vmem:[%s1 + $0x4b0] sm:$0xff]
  %v223 = vld [vmem:[%s1 + $0x4b8] sm:$0xff]
  %v224 = vld [vmem:[%s1 + $0x4c0] sm:$0xf]
  %v225 = vld [vmem:[%s1 + $0x4c4] sm:$0xff]
  %v226 = vld [vmem:[%s1 + $0x4cc] sm:$0xff]
  %v227 = vld [vmem:[%s1 + $0x4d4] sm:$0xf]
  %v228 = vld [vmem:[%s1 + $0x4d8] sm:$0xff]
  %v229 = vld [vmem:[%s1 + $0x4e0] sm:$0xff]
  %v230 = vld [vmem:[%s1 + $0x4e8] sm:$0xf]
  %v231 = vld [vmem:[%s1 + $0x4ec] sm:$0xff]
  %v232 = vld [vmem:[%s1 + $0x4f4] sm:$0xff]
  %v233 = vld [vmem:[%s1 + $0x4fc] sm:$0xf]
  %v234 = vld [vmem:[%s1 + $0x500] sm:$0xff]
  %v235 = vld [vmem:[%s1 + $0x508] sm:$0xff]
  %v236 = vld [vmem:[%s1 + $0x510] sm:$0xf]
  %v237 = vld [vmem:[%s1 + $0x514] sm:$0xff]
  %v238 = vld [vmem:[%s1 + $0x51c] sm:$0xff]
  %v239 = vld [vmem:[%s1 + $0x524] sm:$0xf]
  %v240 = vld [vmem:[%s1 + $0x528] sm:$0xff]
  %v241 = vld [vmem:[%s1 + $0x530] sm:$0xff]
  %v242 = vld [vmem:[%s1 + $0x538] sm:$0xf]
  %v243 = vld [vmem:[%s1 + $0x53c] sm:$0xff]
  %v244 = vld [vmem:[%s1 + $0x544] sm:$0xff]
  %v245 = vld [vmem:[%s1 + $0x54c] sm:$0xf]
  %v246 = vld [vmem:[%s1 + $0x550] sm:$0xff]
  %v247 = vld [vmem:[%s1 + $0x558] sm:$0xff]
  %v248 = vld [vmem:[%s1 + $0x560] sm:$0xf]
  %v249 = vld [vmem:[%s1 + $0x564] sm:$0xff]
  %v250 = vld [vmem:[%s1 + $0x56c] sm:$0xff]
  %v251 = vld [vmem:[%s1 + $0x574] sm:$0xf]
  %v252 = vld [vmem:[%s1 + $0x578] sm:$0xff]
  %v253 = vld [vmem:[%s1 + $0x580] sm:$0xff]
  %v254 = vld [vmem:[%s1 + $0x588] sm:$0xf]
  %v255 = vld [vmem:[%s1 + $0x58c] sm:$0xff]
  %v256 = vld [vmem:[%s1 + $0x594] sm:$0xff]
  %v257 = vld [vmem:[%s1 + $0x59c] sm:$0xf]
  %v258 = vld [vmem:[%s1 + $0x5a0] sm:$0xff]
  %v259 = vld [vmem:[%s1 + $0x5a8] sm:$0xff]
  %v260 = vld [vmem:[%s1 + $0x5b0] sm:$0xf]
  %v261 = vld [vmem:[%s1 + $0x5b4] sm:$0x33]
  %v262 = vld [vmem:[%s1 + $0x5bc] sm:$0x33]
  %v263 = vld [vmem:[%s1 + $0x5c4] sm:$0x3]
  %v264 = vld [vmem:[%s2] sm:$0x1f]
  %v266 = vperm.slane %v264, 0
  %v267 = vperm.slane %v264, 1
  %v268 = vperm.slane %v264, 2
  %v269 = vperm.slane %v264, 3
  %v270 = vperm.slane %v264, 4
  %v279 = vunpack.c.l.b16 %v39
  %v280 = vunpack.c.h.b16 %v39
  %v281 = vunpack.c.l.b16 %v40
  %v282 = vunpack.c.h.b16 %v40
  %v283 = vunpack.c.l.b16 %v41
  %v284 = vpack.c.b16 %v279, %v279
  %v285 = vpack.c.b16 %v280, %v280
  %v286 = vpack.c.b16 %v281, %v281
  %v287 = vpack.c.b16 %v282, %v282
  %v288 = vpack.c.b16 %v283, %v283
  %v515 = vunpack.c.l.b16 %v42
  %v516 = vunpack.c.h.b16 %v42
  %v517 = vunpack.c.l.b16 %v43
  %v518 = vunpack.c.h.b16 %v43
  %v519 = vunpack.c.l.b16 %v44
  %v520 = vunpack.c.l.b16 %v45
  %v521 = vunpack.c.h.b16 %v45
  %v522 = vunpack.c.l.b16 %v46
  %v523 = vunpack.c.h.b16 %v46
  %v524 = vunpack.c.l.b16 %v47
  %v525 = vunpack.c.l.b16 %v48
  %v526 = vunpack.c.h.b16 %v48
  %v527 = vunpack.c.l.b16 %v49
  %v528 = vunpack.c.h.b16 %v49
  %v529 = vunpack.c.l.b16 %v50
  %v530 = vunpack.c.l.b16 %v51
  %v531 = vunpack.c.h.b16 %v51
  %v532 = vunpack.c.l.b16 %v52
  %v533 = vunpack.c.h.b16 %v52
  %v534 = vunpack.c.l.b16 %v53
  %v535 = vunpack.c.l.b16 %v54
  %v536 = vunpack.c.h.b16 %v54
  %v537 = vunpack.c.l.b16 %v55
  %v538 = vunpack.c.h.b16 %v55
  %v539 = vunpack.c.l.b16 %v56
  %v540 = vunpack.c.l.b16 %v57
  %v541 = vunpack.c.h.b16 %v57
  %v542 = vunpack.c.l.b16 %v58
  %v543 = vunpack.c.h.b16 %v58
  %v544 = vunpack.c.l.b16 %v59
  %v545 = vunpack.c.l.b16 %v60
  %v546 = vunpack.c.h.b16 %v60
  %v547 = vunpack.c.l.b16 %v61
  %v548 = vunpack.c.h.b16 %v61
  %v549 = vunpack.c.l.b16 %v62
  %v550 = vunpack.c.l.b16 %v63
  %v551 = vunpack.c.h.b16 %v63
  %v552 = vunpack.c.l.b16 %v64
  %v553 = vunpack.c.h.b16 %v64
  %v554 = vunpack.c.l.b16 %v65
  %v555 = vunpack.c.l.b16 %v66
  %v556 = vunpack.c.h.b16 %v66
  %v557 = vunpack.c.l.b16 %v67
  %v558 = vunpack.c.h.b16 %v67
  %v559 = vunpack.c.l.b16 %v68
  %v560 = vunpack.c.l.b16 %v69
  %v561 = vunpack.c.h.b16 %v69
  %v562 = vunpack.c.l.b16 %v70
  %v563 = vunpack.c.h.b16 %v70
  %v564 = vunpack.c.l.b16 %v71
  %v565 = vunpack.c.l.b16 %v72
  %v566 = vunpack.c.h.b16 %v72
  %v567 = vunpack.c.l.b16 %v73
  %v568 = vunpack.c.h.b16 %v73
  %v569 = vunpack.c.l.b16 %v74
  %v570 = vunpack.c.l.b16 %v75
  %v571 = vunpack.c.h.b16 %v75
  %v572 = vunpack.c.l.b16 %v76
  %v573 = vunpack.c.h.b16 %v76
  %v574 = vunpack.c.l.b16 %v77
  %v575 = vunpack.c.l.b16 %v78
  %v576 = vunpack.c.h.b16 %v78
  %v577 = vunpack.c.l.b16 %v79
  %v578 = vunpack.c.h.b16 %v79
  %v579 = vunpack.c.l.b16 %v80
  %v580 = vunpack.c.l.b16 %v81
  %v581 = vunpack.c.h.b16 %v81
  %v582 = vunpack.c.l.b16 %v82
  %v583 = vunpack.c.h.b16 %v82
  %v584 = vunpack.c.l.b16 %v83
  %v585 = vunpack.c.l.b16 %v84
  %v586 = vunpack.c.h.b16 %v84
  %v587 = vunpack.c.l.b16 %v85
  %v588 = vunpack.c.h.b16 %v85
  %v589 = vunpack.c.l.b16 %v86
  %v590 = vunpack.c.l.b16 %v87
  %v591 = vunpack.c.h.b16 %v87
  %v592 = vunpack.c.l.b16 %v88
  %v593 = vunpack.c.h.b16 %v88
  %v594 = vunpack.c.l.b16 %v89
  %v595 = vunpack.c.l.b16 %v90
  %v596 = vunpack.c.h.b16 %v90
  %v597 = vunpack.c.l.b16 %v91
  %v598 = vunpack.c.h.b16 %v91
  %v599 = vunpack.c.l.b16 %v92
  %v600 = vunpack.c.l.b16 %v93
  %v601 = vunpack.c.h.b16 %v93
  %v602 = vunpack.c.l.b16 %v94
  %v603 = vunpack.c.h.b16 %v94
  %v604 = vunpack.c.l.b16 %v95
  %v605 = vunpack.c.l.b16 %v96
  %v606 = vunpack.c.h.b16 %v96
  %v607 = vunpack.c.l.b16 %v97
  %v608 = vunpack.c.h.b16 %v97
  %v609 = vunpack.c.l.b16 %v98
  %v610 = vunpack.c.l.b16 %v99
  %v611 = vunpack.c.h.b16 %v99
  %v612 = vunpack.c.l.b16 %v100
  %v613 = vunpack.c.h.b16 %v100
  %v614 = vunpack.c.l.b16 %v101
  %v615 = vunpack.c.l.b16 %v102
  %v616 = vunpack.c.h.b16 %v102
  %v617 = vunpack.c.l.b16 %v103
  %v618 = vunpack.c.h.b16 %v103
  %v619 = vunpack.c.l.b16 %v104
  %v620 = vunpack.c.l.b16 %v105
  %v621 = vunpack.c.h.b16 %v105
  %v622 = vunpack.c.l.b16 %v106
  %v623 = vunpack.c.h.b16 %v106
  %v624 = vunpack.c.l.b16 %v107
  %v625 = vunpack.c.l.b16 %v108
  %v626 = vunpack.c.h.b16 %v108
  %v627 = vunpack.c.l.b16 %v109
  %v628 = vunpack.c.h.b16 %v109
  %v629 = vunpack.c.l.b16 %v110
  %v630 = vunpack.c.l.b16 %v111
  %v631 = vunpack.c.h.b16 %v111
  %v632 = vunpack.c.l.b16 %v112
  %v633 = vunpack.c.h.b16 %v112
  %v634 = vunpack.c.l.b16 %v113
  %v635 = vunpack.c.l.b16 %v114
  %v636 = vunpack.c.h.b16 %v114
  %v637 = vunpack.c.l.b16 %v115
  %v638 = vunpack.c.h.b16 %v115
  %v639 = vunpack.c.l.b16 %v116
  %v640 = vunpack.c.l.b16 %v117
  %v641 = vunpack.c.h.b16 %v117
  %v642 = vunpack.c.l.b16 %v118
  %v643 = vunpack.c.h.b16 %v118
  %v644 = vunpack.c.l.b16 %v119
  %v645 = vunpack.c.l.b16 %v120
  %v646 = vunpack.c.h.b16 %v120
  %v647 = vunpack.c.l.b16 %v121
  %v648 = vunpack.c.h.b16 %v121
  %v649 = vunpack.c.l.b16 %v122
  %v650 = vunpack.c.l.b16 %v123
  %v651 = vunpack.c.h.b16 %v123
  %v652 = vunpack.c.l.b16 %v124
  %v653 = vunpack.c.h.b16 %v124
  %v654 = vunpack.c.l.b16 %v125
  %v655 = vunpack.c.l.b16 %v126
  %v656 = vunpack.c.h.b16 %v126
  %v657 = vunpack.c.l.b16 %v127
  %v658 = vunpack.c.h.b16 %v127
  %v659 = vunpack.c.l.b16 %v128
  %v660 = vunpack.c.l.b16 %v129
  %v661 = vunpack.c.h.b16 %v129
  %v662 = vunpack.c.l.b16 %v130
  %v663 = vunpack.c.h.b16 %v130
  %v664 = vunpack.c.l.b16 %v131
  %v665 = vunpack.c.l.b16 %v132
  %v666 = vunpack.c.h.b16 %v132
  %v667 = vunpack.c.l.b16 %v133
  %v668 = vunpack.c.h.b16 %v133
  %v669 = vunpack.c.l.b16 %v134
  %v670 = vunpack.c.l.b16 %v135
  %v671 = vunpack.c.h.b16 %v135
  %v672 = vunpack.c.l.b16 %v136
  %v673 = vunpack.c.h.b16 %v136
  %v674 = vunpack.c.l.b16 %v137
  %v675 = vunpack.c.l.b16 %v138
  %v676 = vunpack.c.h.b16 %v138
  %v677 = vunpack.c.l.b16 %v139
  %v678 = vunpack.c.h.b16 %v139
  %v679 = vunpack.c.l.b16 %v140
  %v680 = vunpack.c.l.b16 %v141
  %v681 = vunpack.c.h.b16 %v141
  %v682 = vunpack.c.l.b16 %v142
  %v683 = vunpack.c.h.b16 %v142
  %v684 = vunpack.c.l.b16 %v143
  %v685 = vunpack.c.l.b16 %v144
  %v686 = vunpack.c.h.b16 %v144
  %v687 = vunpack.c.l.b16 %v145
  %v688 = vunpack.c.h.b16 %v145
  %v689 = vunpack.c.l.b16 %v146
  %v690 = vunpack.c.l.b16 %v147
  %v691 = vunpack.c.h.b16 %v147
  %v692 = vunpack.c.l.b16 %v148
  %v693 = vunpack.c.h.b16 %v148
  %v694 = vunpack.c.l.b16 %v149
  %v695 = vunpack.c.l.b16 %v150
  %v696 = vunpack.c.h.b16 %v150
  %v697 = vunpack.c.l.b16 %v151
  %v698 = vunpack.c.h.b16 %v151
  %v699 = vunpack.c.l.b16 %v152
  %v700 = vunpack.c.l.b16 %v153
  %v701 = vunpack.c.h.b16 %v153
  %v702 = vunpack.c.l.b16 %v154
  %v703 = vunpack.c.h.b16 %v154
  %v704 = vunpack.c.l.b16 %v155
  %v705 = vunpack.c.l.b16 %v156
  %v706 = vunpack.c.h.b16 %v156
  %v707 = vunpack.c.l.b16 %v157
  %v708 = vunpack.c.h.b16 %v157
  %v709 = vunpack.c.l.b16 %v158
  %v710 = vunpack.c.l.b16 %v159
  %v711 = vunpack.c.h.b16 %v159
  %v712 = vunpack.c.l.b16 %v160
  %v713 = vunpack.c.h.b16 %v160
  %v714 = vunpack.c.l.b16 %v161
  %v715 = vunpack.c.l.b16 %v162
  %v716 = vunpack.c.h.b16 %v162
  %v717 = vunpack.c.l.b16 %v163
  %v718 = vunpack.c.h.b16 %v163
  %v719 = vunpack.c.l.b16 %v164
  %v720 = vunpack.c.l.b16 %v165
  %v721 = vunpack.c.h.b16 %v165
  %v722 = vunpack.c.l.b16 %v166
  %v723 = vunpack.c.h.b16 %v166
  %v724 = vunpack.c.l.b16 %v167
  %v725 = vunpack.c.l.b16 %v168
  %v726 = vunpack.c.h.b16 %v168
  %v727 = vunpack.c.l.b16 %v169
  %v728 = vunpack.c.h.b16 %v169
  %v729 = vunpack.c.l.b16 %v170
  %v730 = vunpack.c.l.b16 %v171
  %v731 = vunpack.c.h.b16 %v171
  %v732 = vunpack.c.l.b16 %v172
  %v733 = vunpack.c.h.b16 %v172
  %v734 = vunpack.c.l.b16 %v173
  %v735 = vunpack.c.l.b16 %v174
  %v736 = vunpack.c.h.b16 %v174
  %v737 = vunpack.c.l.b16 %v175
  %v738 = vunpack.c.h.b16 %v175
  %v739 = vunpack.c.l.b16 %v176
  %v740 = vunpack.c.l.b16 %v177
  %v741 = vunpack.c.h.b16 %v177
  %v742 = vunpack.c.l.b16 %v178
  %v743 = vunpack.c.h.b16 %v178
  %v744 = vunpack.c.l.b16 %v179
  %v745 = vunpack.c.l.b16 %v180
  %v746 = vunpack.c.h.b16 %v180
  %v747 = vunpack.c.l.b16 %v181
  %v748 = vunpack.c.h.b16 %v181
  %v749 = vunpack.c.l.b16 %v182
  %v750 = vunpack.c.l.b16 %v183
  %v751 = vunpack.c.h.b16 %v183
  %v752 = vunpack.c.l.b16 %v184
  %v753 = vunpack.c.h.b16 %v184
  %v754 = vunpack.c.l.b16 %v185
  %v755 = vunpack.c.l.b16 %v186
  %v756 = vunpack.c.h.b16 %v186
  %v757 = vunpack.c.l.b16 %v187
  %v758 = vunpack.c.h.b16 %v187
  %v759 = vunpack.c.l.b16 %v188
  %v760 = vunpack.c.l.b16 %v189
  %v761 = vunpack.c.h.b16 %v189
  %v762 = vunpack.c.l.b16 %v190
  %v763 = vunpack.c.h.b16 %v190
  %v764 = vunpack.c.l.b16 %v191
  %v765 = vunpack.c.l.b16 %v192
  %v766 = vunpack.c.h.b16 %v192
  %v767 = vunpack.c.l.b16 %v193
  %v768 = vunpack.c.h.b16 %v193
  %v769 = vunpack.c.l.b16 %v194
  %v770 = vunpack.c.l.b16 %v195
  %v771 = vunpack.c.h.b16 %v195
  %v772 = vunpack.c.l.b16 %v196
  %v773 = vunpack.c.h.b16 %v196
  %v774 = vunpack.c.l.b16 %v197
  %v775 = vunpack.c.l.b16 %v198
  %v776 = vunpack.c.h.b16 %v198
  %v777 = vunpack.c.l.b16 %v199
  %v778 = vunpack.c.h.b16 %v199
  %v779 = vunpack.c.l.b16 %v200
  %v780 = vunpack.c.l.b16 %v201
  %v781 = vunpack.c.h.b16 %v201
  %v782 = vunpack.c.l.b16 %v202
  %v783 = vunpack.c.h.b16 %v202
  %v784 = vunpack.c.l.b16 %v203
  %v785 = vunpack.c.l.b16 %v204
  %v786 = vunpack.c.h.b16 %v204
  %v787 = vunpack.c.l.b16 %v205
  %v788 = vunpack.c.h.b16 %v205
  %v789 = vunpack.c.l.b16 %v206
  %v790 = vunpack.c.l.b16 %v207
  %v791 = vunpack.c.h.b16 %v207
  %v792 = vunpack.c.l.b16 %v208
  %v793 = vunpack.c.h.b16 %v208
  %v794 = vunpack.c.l.b16 %v209
  %v795 = vunpack.c.l.b16 %v210
  %v796 = vunpack.c.h.b16 %v210
  %v797 = vunpack.c.l.b16 %v211
  %v798 = vunpack.c.h.b16 %v211
  %v799 = vunpack.c.l.b16 %v212
  %v800 = vunpack.c.l.b16 %v213
  %v801 = vunpack.c.h.b16 %v213
  %v802 = vunpack.c.l.b16 %v214
  %v803 = vunpack.c.h.b16 %v214
  %v804 = vunpack.c.l.b16 %v215
  %v805 = vunpack.c.l.b16 %v216
  %v806 = vunpack.c.h.b16 %v216
  %v807 = vunpack.c.l.b16 %v217
  %v808 = vunpack.c.h.b16 %v217
  %v809 = vunpack.c.l.b16 %v218
  %v810 = vunpack.c.l.b16 %v219
  %v811 = vunpack.c.h.b16 %v219
  %v812 = vunpack.c.l.b16 %v220
  %v813 = vunpack.c.h.b16 %v220
  %v814 = vunpack.c.l.b16 %v221
  %v815 = vunpack.c.l.b16 %v222
  %v816 = vunpack.c.h.b16 %v222
  %v817 = vunpack.c.l.b16 %v223
  %v818 = vunpack.c.h.b16 %v223
  %v819 = vunpack.c.l.b16 %v224
  %v820 = vunpack.c.l.b16 %v225
  %v821 = vunpack.c.h.b16 %v225
  %v822 = vunpack.c.l.b16 %v226
  %v823 = vunpack.c.h.b16 %v226
  %v824 = vunpack.c.l.b16 %v227
  %v825 = vunpack.c.l.b16 %v228
  %v826 = vunpack.c.h.b16 %v228
  %v827 = vunpack.c.l.b16 %v229
  %v828 = vunpack.c.h.b16 %v229
  %v829 = vunpack.c.l.b16 %v230
  %v830 = vunpack.c.l.b16 %v231
  %v831 = vunpack.c.h.b16 %v231
  %v832 = vunpack.c.l.b16 %v232
  %v833 = vunpack.c.h.b16 %v232
  %v834 = vunpack.c.l.b16 %v233
  %v835 = vunpack.c.l.b16 %v234
  %v836 = vunpack.c.h.b16 %v234
  %v837 = vunpack.c.l.b16 %v235
  %v838 = vunpack.c.h.b16 %v235
  %v839 = vunpack.c.l.b16 %v236
  %v840 = vunpack.c.l.b16 %v237
  %v841 = vunpack.c.h.b16 %v237
  %v842 = vunpack.c.l.b16 %v238
  %v843 = vunpack.c.h.b16 %v238
  %v844 = vunpack.c.l.b16 %v239
  %v845 = vunpack.c.l.b16 %v240
  %v846 = vunpack.c.h.b16 %v240
  %v847 = vunpack.c.l.b16 %v241
  %v848 = vunpack.c.h.b16 %v241
  %v849 = vunpack.c.l.b16 %v242
  %v850 = vunpack.c.l.b16 %v243
  %v851 = vunpack.c.h.b16 %v243
  %v852 = vunpack.c.l.b16 %v244
  %v853 = vunpack.c.h.b16 %v244
  %v854 = vunpack.c.l.b16 %v245
  %v855 = vunpack.c.l.b16 %v246
  %v856 = vunpack.c.h.b16 %v246
  %v857 = vunpack.c.l.b16 %v247
  %v858 = vunpack.c.h.b16 %v247
  %v859 = vunpack.c.l.b16 %v248
  %v860 = vunpack.c.l.b16 %v249
  %v861 = vunpack.c.h.b16 %v249
  %v862 = vunpack.c.l.b16 %v250
  %v863 = vunpack.c.h.b16 %v250
  %v864 = vunpack.c.l.b16 %v251
  %v865 = vunpack.c.l.b16 %v252
  %v866 = vunpack.c.h.b16 %v252
  %v867 = vunpack.c.l.b16 %v253
  %v868 = vunpack.c.h.b16 %v253
  %v869 = vunpack.c.l.b16 %v254
  %v870 = vunpack.c.l.b16 %v255
  %v871 = vunpack.c.h.b16 %v255
  %v872 = vunpack.c.l.b16 %v256
  %v873 = vunpack.c.h.b16 %v256
  %v874 = vunpack.c.l.b16 %v257
  %v875 = vunpack.c.l.b16 %v258
  %v876 = vunpack.c.h.b16 %v258
  %v877 = vunpack.c.l.b16 %v259
  %v878 = vunpack.c.h.b16 %v259
  %v879 = vunpack.c.l.b16 %v260
  %v880 = vunpack.c.l.b16 %v261
  %v881 = vunpack.c.h.b16 %v261
  %v882 = vunpack.c.l.b16 %v262
  %v883 = vunpack.c.h.b16 %v262
  %v884 = vunpack.c.l.b16 %v263
  %v885 = vpack.c.b16 %v520, %v515
  %v886 = vpack.c.b16 %v521, %v516
  %v887 = vpack.c.b16 %v522, %v517
  %v888 = vpack.c.b16 %v523, %v518
  %v889 = vpack.c.b16 %v524, %v519
  %v890 = vpack.c.b16 %v530, %v525
  %v891 = vpack.c.b16 %v531, %v526
  %v892 = vpack.c.b16 %v532, %v527
  %v893 = vpack.c.b16 %v533, %v528
  %v894 = vpack.c.b16 %v534, %v529
  %v895 = vpack.c.b16 %v540, %v535
  %v896 = vpack.c.b16 %v541, %v536
  %v897 = vpack.c.b16 %v542, %v537
  %v898 = vpack.c.b16 %v543, %v538
  %v899 = vpack.c.b16 %v544, %v539
  %v900 = vpack.c.b16 %v550, %v545
  %v901 = vpack.c.b16 %v551, %v546
  %v902 = vpack.c.b16 %v552, %v547
  %v903 = vpack.c.b16 %v553, %v548
  %v904 = vpack.c.b16 %v554, %v549
  %v905 = vpack.c.b16 %v560, %v555
  %v906 = vpack.c.b16 %v561, %v556
  %v907 = vpack.c.b16 %v562, %v557
  %v908 = vpack.c.b16 %v563, %v558
  %v909 = vpack.c.b16 %v564, %v559
  %v910 = vpack.c.b16 %v570, %v565
  %v911 = vpack.c.b16 %v571, %v566
  %v912 = vpack.c.b16 %v572, %v567
  %v913 = vpack.c.b16 %v573, %v568
  %v914 = vpack.c.b16 %v574, %v569
  %v915 = vpack.c.b16 %v580, %v575
  %v916 = vpack.c.b16 %v581, %v576
  %v917 = vpack.c.b16 %v582, %v577
  %v918 = vpack.c.b16 %v583, %v578
  %v919 = vpack.c.b16 %v584, %v579
  %v920 = vpack.c.b16 %v590, %v585
  %v921 = vpack.c.b16 %v591, %v586
  %v922 = vpack.c.b16 %v592, %v587
  %v923 = vpack.c.b16 %v593, %v588
  %v924 = vpack.c.b16 %v594, %v589
  %v925 = vpack.c.b16 %v600, %v595
  %v926 = vpack.c.b16 %v601, %v596
  %v927 = vpack.c.b16 %v602, %v597
  %v928 = vpack.c.b16 %v603, %v598
  %v929 = vpack.c.b16 %v604, %v599
  %v930 = vpack.c.b16 %v610, %v605
  %v931 = vpack.c.b16 %v611, %v606
  %v932 = vpack.c.b16 %v612, %v607
  %v933 = vpack.c.b16 %v613, %v608
  %v934 = vpack.c.b16 %v614, %v609
  %v935 = vpack.c.b16 %v620, %v615
  %v936 = vpack.c.b16 %v621, %v616
  %v937 = vpack.c.b16 %v622, %v617
  %v938 = vpack.c.b16 %v623, %v618
  %v939 = vpack.c.b16 %v624, %v619
  %v940 = vpack.c.b16 %v630, %v625
  %v941 = vpack.c.b16 %v631, %v626
  %v942 = vpack.c.b16 %v632, %v627
  %v943 = vpack.c.b16 %v633, %v628
  %v944 = vpack.c.b16 %v634, %v629
  %v945 = vpack.c.b16 %v640, %v635
  %v946 = vpack.c.b16 %v641, %v636
  %v947 = vpack.c.b16 %v642, %v637
  %v948 = vpack.c.b16 %v643, %v638
  %v949 = vpack.c.b16 %v644, %v639
  %v950 = vpack.c.b16 %v650, %v645
  %v951 = vpack.c.b16 %v651, %v646
  %v952 = vpack.c.b16 %v652, %v647
  %v953 = vpack.c.b16 %v653, %v648
  %v954 = vpack.c.b16 %v654, %v649
  %v955 = vpack.c.b16 %v660, %v655
  %v956 = vpack.c.b16 %v661, %v656
  %v957 = vpack.c.b16 %v662, %v657
  %v958 = vpack.c.b16 %v663, %v658
  %v959 = vpack.c.b16 %v664, %v659
  %v960 = vpack.c.b16 %v670, %v665
  %v961 = vpack.c.b16 %v671, %v666
  %v962 = vpack.c.b16 %v672, %v667
  %v963 = vpack.c.b16 %v673, %v668
  %v964 = vpack.c.b16 %v674, %v669
  %v965 = vpack.c.b16 %v680, %v675
  %v966 = vpack.c.b16 %v681, %v676
  %v967 = vpack.c.b16 %v682, %v677
  %v968 = vpack.c.b16 %v683, %v678
  %v969 = vpack.c.b16 %v684, %v679
  %v970 = vpack.c.b16 %v690, %v685
  %v971 = vpack.c.b16 %v691, %v686
  %v972 = vpack.c.b16 %v692, %v687
  %v973 = vpack.c.b16 %v693, %v688
  %v974 = vpack.c.b16 %v694, %v689
  %v975 = vpack.c.b16 %v700, %v695
  %v976 = vpack.c.b16 %v701, %v696
  %v977 = vpack.c.b16 %v702, %v697
  %v978 = vpack.c.b16 %v703, %v698
  %v979 = vpack.c.b16 %v704, %v699
  %v980 = vpack.c.b16 %v710, %v705
  %v981 = vpack.c.b16 %v711, %v706
  %v982 = vpack.c.b16 %v712, %v707
  %v983 = vpack.c.b16 %v713, %v708
  %v984 = vpack.c.b16 %v714, %v709
  %v985 = vpack.c.b16 %v720, %v715
  %v986 = vpack.c.b16 %v721, %v716
  %v987 = vpack.c.b16 %v722, %v717
  %v988 = vpack.c.b16 %v723, %v718
  %v989 = vpack.c.b16 %v724, %v719
  %v990 = vpack.c.b16 %v730, %v725
  %v991 = vpack.c.b16 %v731, %v726
  %v992 = vpack.c.b16 %v732, %v727
  %v993 = vpack.c.b16 %v733, %v728
  %v994 = vpack.c.b16 %v734, %v729
  %v995 = vpack.c.b16 %v740, %v735
  %v996 = vpack.c.b16 %v741, %v736
  %v997 = vpack.c.b16 %v742, %v737
  %v998 = vpack.c.b16 %v743, %v738
  %v999 = vpack.c.b16 %v744, %v739
  %v1000 = vpack.c.b16 %v750, %v745
  %v1001 = vpack.c.b16 %v751, %v746
  %v1002 = vpack.c.b16 %v752, %v747
  %v1003 = vpack.c.b16 %v753, %v748
  %v1004 = vpack.c.b16 %v754, %v749
  %v1005 = vpack.c.b16 %v760, %v755
  %v1006 = vpack.c.b16 %v761, %v756
  %v1007 = vpack.c.b16 %v762, %v757
  %v1008 = vpack.c.b16 %v763, %v758
  %v1009 = vpack.c.b16 %v764, %v759
  %v1010 = vpack.c.b16 %v770, %v765
  %v1011 = vpack.c.b16 %v771, %v766
  %v1012 = vpack.c.b16 %v772, %v767
  %v1013 = vpack.c.b16 %v773, %v768
  %v1014 = vpack.c.b16 %v774, %v769
  %v1015 = vpack.c.b16 %v780, %v775
  %v1016 = vpack.c.b16 %v781, %v776
  %v1017 = vpack.c.b16 %v782, %v777
  %v1018 = vpack.c.b16 %v783, %v778
  %v1019 = vpack.c.b16 %v784, %v779
  %v1020 = vpack.c.b16 %v790, %v785
  %v1021 = vpack.c.b16 %v791, %v786
  %v1022 = vpack.c.b16 %v792, %v787
  %v1023 = vpack.c.b16 %v793, %v788
  %v1024 = vpack.c.b16 %v794, %v789
  %v1025 = vpack.c.b16 %v800, %v795
  %v1026 = vpack.c.b16 %v801, %v796
  %v1027 = vpack.c.b16 %v802, %v797
  %v1028 = vpack.c.b16 %v803, %v798
  %v1029 = vpack.c.b16 %v804, %v799
  %v1030 = vpack.c.b16 %v810, %v805
  %v1031 = vpack.c.b16 %v811, %v806
  %v1032 = vpack.c.b16 %v812, %v807
  %v1033 = vpack.c.b16 %v813, %v808
  %v1034 = vpack.c.b16 %v814, %v809
  %v1035 = vpack.c.b16 %v820, %v815
  %v1036 = vpack.c.b16 %v821, %v816
  %v1037 = vpack.c.b16 %v822, %v817
  %v1038 = vpack.c.b16 %v823, %v818
  %v1039 = vpack.c.b16 %v824, %v819
  %v1040 = vpack.c.b16 %v830, %v825
  %v1041 = vpack.c.b16 %v831, %v826
  %v1042 = vpack.c.b16 %v832, %v827
  %v1043 = vpack.c.b16 %v833, %v828
  %v1044 = vpack.c.b16 %v834, %v829
  %v1045 = vpack.c.b16 %v840, %v835
  %v1046 = vpack.c.b16 %v841, %v836
  %v1047 = vpack.c.b16 %v842, %v837
  %v1048 = vpack.c.b16 %v843, %v838
  %v1049 = vpack.c.b16 %v844, %v839
  %v1050 = vpack.c.b16 %v850, %v845
  %v1051 = vpack.c.b16 %v851, %v846
  %v1052 = vpack.c.b16 %v852, %v847
  %v1053 = vpack.c.b16 %v853, %v848
  %v1054 = vpack.c.b16 %v854, %v849
  %v1055 = vpack.c.b16 %v860, %v855
  %v1056 = vpack.c.b16 %v861, %v856
  %v1057 = vpack.c.b16 %v862, %v857
  %v1058 = vpack.c.b16 %v863, %v858
  %v1059 = vpack.c.b16 %v864, %v859
  %v1060 = vpack.c.b16 %v870, %v865
  %v1061 = vpack.c.b16 %v871, %v866
  %v1062 = vpack.c.b16 %v872, %v867
  %v1063 = vpack.c.b16 %v873, %v868
  %v1064 = vpack.c.b16 %v874, %v869
  %v1065 = vpack.c.b16 %v880, %v875
  %v1066 = vpack.c.b16 %v881, %v876
  %v1067 = vpack.c.b16 %v882, %v877
  %v1068 = vpack.c.b16 %v883, %v878
  %v1069 = vpack.c.b16 %v884, %v879
  %vm1250 = vcmask 621568
  %v1252 = vsel %vm1250, %v288, 0
  %vm1254 = vcmask 1045504
  %v1256 = vsel %vm1254, %v1065, 0
  %v1259 = vsel %vm1254, %v1066, 0
  %v1262 = vsel %vm1254, %v1067, 0
  %v1265 = vsel %vm1254, %v1068, 0
  %v1268 = vsel %vm1254, %v1069, 0
  %1270 = vmatpush.bf16.msra.mxu0 %v920
  %1271 = vmatpush.bf16.msra.mxu0 %v915
  %1272 = vmatpush.bf16.msra.mxu0 %v910
  %1273 = vmatpush.bf16.msra.mxu0 %v905
  %1274 = vmatpush.bf16.msra.mxu0 %v900
  %1275 = vmatpush.bf16.msra.mxu0 %v895
  %1276 = vmatpush.bf16.msra.mxu0 %v890
  %1277 = vmatpush.bf16.msra.mxu0 %v885
  %1278 = vmatmul.bf16.gmra.mxu0 %v284
  %v1279 = vpop.f32.mrf.mxu0
  %v1280 = vadd.f32 %v266, %v1279
  %v1281 = vpop.f32.mrf.mxu0
  %1282 = vdwg.mxu0
  %1283 = vmatpush.bf16.msra.mxu0 %v960
  %1284 = vmatpush.bf16.msra.mxu0 %v955
  %1285 = vmatpush.bf16.msra.mxu0 %v950
  %1286 = vmatpush.bf16.msra.mxu0 %v945
  %1287 = vmatpush.bf16.msra.mxu0 %v940
  %1288 = vmatpush.bf16.msra.mxu0 %v935
  %1289 = vmatpush.bf16.msra.mxu0 %v930
  %1290 = vmatpush.bf16.msra.mxu0 %v925
  %1291 = vmatmul.bf16.gmra.mxu0 %v285
  %v1292 = vpop.f32.mrf.mxu0
  %v1293 = vadd.f32 %v1280, %v1292
  %v1294 = vpop.f32.mrf.mxu0
  %1295 = vdwg.mxu0
  %1296 = vmatpush.bf16.msra.mxu0 %v1000
  %1297 = vmatpush.bf16.msra.mxu0 %v995
  %1298 = vmatpush.bf16.msra.mxu0 %v990
  %1299 = vmatpush.bf16.msra.mxu0 %v985
  %1300 = vmatpush.bf16.msra.mxu0 %v980
  %1301 = vmatpush.bf16.msra.mxu0 %v975
  %1302 = vmatpush.bf16.msra.mxu0 %v970
  %1303 = vmatpush.bf16.msra.mxu0 %v965
  %1304 = vmatmul.bf16.gmra.mxu0 %v286
  %v1305 = vpop.f32.mrf.mxu0
  %v1306 = vadd.f32 %v1293, %v1305
  %v1307 = vpop.f32.mrf.mxu0
  %1308 = vdwg.mxu0
  %1309 = vmatpush.bf16.msra.mxu0 %v1040
  %1310 = vmatpush.bf16.msra.mxu0 %v1035
  %1311 = vmatpush.bf16.msra.mxu0 %v1030
  %1312 = vmatpush.bf16.msra.mxu0 %v1025
  %1313 = vmatpush.bf16.msra.mxu0 %v1020
  %1314 = vmatpush.bf16.msra.mxu0 %v1015
  %1315 = vmatpush.bf16.msra.mxu0 %v1010
  %1316 = vmatpush.bf16.msra.mxu0 %v1005
  %1317 = vmatmul.bf16.gmra.mxu0 %v287
  %v1318 = vpop.f32.mrf.mxu0
  %v1319 = vadd.f32 %v1306, %v1318
  %v1320 = vpop.f32.mrf.mxu0
  %1321 = vdwg.mxu0
  %1322 = vmatpush.bf16.msra.mxu0 0
  %1323 = vmatpush.bf16.msra.mxu0 0
  %1324 = vmatpush.bf16.msra.mxu0 0
  %1325 = vmatpush.bf16.msra.mxu0 %v1256
  %1326 = vmatpush.bf16.msra.mxu0 %v1060
  %1327 = vmatpush.bf16.msra.mxu0 %v1055
  %1328 = vmatpush.bf16.msra.mxu0 %v1050
  %1329 = vmatpush.bf16.msra.mxu0 %v1045
  %1330 = vmatmul.bf16.gmra.mxu0 %v1252
  %v1331 = vpop.f32.mrf.mxu0
  %v1332 = vadd.f32 %v1319, %v1331
  %v1333 = vpop.f32.mrf.mxu0
  %1334 = vdwg.mxu0
  %1335 = vmatpush.bf16.msra.mxu0 %v921
  %1336 = vmatpush.bf16.msra.mxu0 %v916
  %1337 = vmatpush.bf16.msra.mxu0 %v911
  %1338 = vmatpush.bf16.msra.mxu0 %v906
  %1339 = vmatpush.bf16.msra.mxu0 %v901
  %1340 = vmatpush.bf16.msra.mxu0 %v896
  %1341 = vmatpush.bf16.msra.mxu0 %v891
  %1342 = vmatpush.bf16.msra.mxu0 %v886
  %1343 = vmatmul.bf16.gmra.mxu0 %v284
  %v1344 = vpop.f32.mrf.mxu0
  %v1345 = vadd.f32 %v267, %v1344
  %v1346 = vpop.f32.mrf.mxu0
  %1347 = vdwg.mxu0
  %1348 = vmatpush.bf16.msra.mxu0 %v961
  %1349 = vmatpush.bf16.msra.mxu0 %v956
  %1350 = vmatpush.bf16.msra.mxu0 %v951
  %1351 = vmatpush.bf16.msra.mxu0 %v946
  %1352 = vmatpush.bf16.msra.mxu0 %v941
  %1353 = vmatpush.bf16.msra.mxu0 %v936
  %1354 = vmatpush.bf16.msra.mxu0 %v931
  %1355 = vmatpush.bf16.msra.mxu0 %v926
  %1356 = vmatmul.bf16.gmra.mxu0 %v285
  %v1357 = vpop.f32.mrf.mxu0
  %v1358 = vadd.f32 %v1345, %v1357
  %v1359 = vpop.f32.mrf.mxu0
  %1360 = vdwg.mxu0
  %1361 = vmatpush.bf16.msra.mxu0 %v1001
  %1362 = vmatpush.bf16.msra.mxu0 %v996
  %1363 = vmatpush.bf16.msra.mxu0 %v991
  %1364 = vmatpush.bf16.msra.mxu0 %v986
  %1365 = vmatpush.bf16.msra.mxu0 %v981
  %1366 = vmatpush.bf16.msra.mxu0 %v976
  %1367 = vmatpush.bf16.msra.mxu0 %v971
  %1368 = vmatpush.bf16.msra.mxu0 %v966
  %1369 = vmatmul.bf16.gmra.mxu0 %v286
  %v1370 = vpop.f32.mrf.mxu0
  %v1371 = vadd.f32 %v1358, %v1370
  %v1372 = vpop.f32.mrf.mxu0
  %1373 = vdwg.mxu0
  %1374 = vmatpush.bf16.msra.mxu0 %v1041
  %1375 = vmatpush.bf16.msra.mxu0 %v1036
  %1376 = vmatpush.bf16.msra.mxu0 %v1031
  %1377 = vmatpush.bf16.msra.mxu0 %v1026
  %1378 = vmatpush.bf16.msra.mxu0 %v1021
  %1379 = vmatpush.bf16.msra.mxu0 %v1016
  %1380 = vmatpush.bf16.msra.mxu0 %v1011
  %1381 = vmatpush.bf16.msra.mxu0 %v1006
  %1382 = vmatmul.bf16.gmra.mxu0 %v287
  %v1383 = vpop.f32.mrf.mxu0
  %v1384 = vadd.f32 %v1371, %v1383
  %v1385 = vpop.f32.mrf.mxu0
  %1386 = vdwg.mxu0
  %1387 = vmatpush.bf16.msra.mxu0 0
  %1388 = vmatpush.bf16.msra.mxu0 0
  %1389 = vmatpush.bf16.msra.mxu0 0
  %1390 = vmatpush.bf16.msra.mxu0 %v1259
  %1391 = vmatpush.bf16.msra.mxu0 %v1061
  %1392 = vmatpush.bf16.msra.mxu0 %v1056
  %1393 = vmatpush.bf16.msra.mxu0 %v1051
  %1394 = vmatpush.bf16.msra.mxu0 %v1046
  %1395 = vmatmul.bf16.gmra.mxu0 %v1252
  %v1396 = vpop.f32.mrf.mxu0
  %v1397 = vadd.f32 %v1384, %v1396
  %v1398 = vpop.f32.mrf.mxu0
  %1399 = vdwg.mxu0
  %1400 = vmatpush.bf16.msra.mxu0 %v922
  %1401 = vmatpush.bf16.msra.mxu0 %v917
  %1402 = vmatpush.bf16.msra.mxu0 %v912
  %1403 = vmatpush.bf16.msra.mxu0 %v907
  %1404 = vmatpush.bf16.msra.mxu0 %v902
  %1405 = vmatpush.bf16.msra.mxu0 %v897
  %1406 = vmatpush.bf16.msra.mxu0 %v892
  %1407 = vmatpush.bf16.msra.mxu0 %v887
  %1408 = vmatmul.bf16.gmra.mxu0 %v284
  %v1409 = vpop.f32.mrf.mxu0
  %v1410 = vadd.f32 %v268, %v1409
  %v1411 = vpop.f32.mrf.mxu0
  %1412 = vdwg.mxu0
  %1413 = vmatpush.bf16.msra.mxu0 %v962
  %1414 = vmatpush.bf16.msra.mxu0 %v957
  %1415 = vmatpush.bf16.msra.mxu0 %v952
  %1416 = vmatpush.bf16.msra.mxu0 %v947
  %1417 = vmatpush.bf16.msra.mxu0 %v942
  %1418 = vmatpush.bf16.msra.mxu0 %v937
  %1419 = vmatpush.bf16.msra.mxu0 %v932
  %1420 = vmatpush.bf16.msra.mxu0 %v927
  %1421 = vmatmul.bf16.gmra.mxu0 %v285
  %v1422 = vpop.f32.mrf.mxu0
  %v1423 = vadd.f32 %v1410, %v1422
  %v1424 = vpop.f32.mrf.mxu0
  %1425 = vdwg.mxu0
  %1426 = vmatpush.bf16.msra.mxu0 %v1002
  %1427 = vmatpush.bf16.msra.mxu0 %v997
  %1428 = vmatpush.bf16.msra.mxu0 %v992
  %1429 = vmatpush.bf16.msra.mxu0 %v987
  %1430 = vmatpush.bf16.msra.mxu0 %v982
  %1431 = vmatpush.bf16.msra.mxu0 %v977
  %1432 = vmatpush.bf16.msra.mxu0 %v972
  %1433 = vmatpush.bf16.msra.mxu0 %v967
  %1434 = vmatmul.bf16.gmra.mxu0 %v286
  %v1435 = vpop.f32.mrf.mxu0
  %v1436 = vadd.f32 %v1423, %v1435
  %v1437 = vpop.f32.mrf.mxu0
  %1438 = vdwg.mxu0
  %1439 = vmatpush.bf16.msra.mxu0 %v1042
  %1440 = vmatpush.bf16.msra.mxu0 %v1037
  %1441 = vmatpush.bf16.msra.mxu0 %v1032
  %1442 = vmatpush.bf16.msra.mxu0 %v1027
  %1443 = vmatpush.bf16.msra.mxu0 %v1022
  %1444 = vmatpush.bf16.msra.mxu0 %v1017
  %1445 = vmatpush.bf16.msra.mxu0 %v1012
  %1446 = vmatpush.bf16.msra.mxu0 %v1007
  %1447 = vmatmul.bf16.gmra.mxu0 %v287
  %v1448 = vpop.f32.mrf.mxu0
  %v1449 = vadd.f32 %v1436, %v1448
  %v1450 = vpop.f32.mrf.mxu0
  %1451 = vdwg.mxu0
  %1452 = vmatpush.bf16.msra.mxu0 0
  %1453 = vmatpush.bf16.msra.mxu0 0
  %1454 = vmatpush.bf16.msra.mxu0 0
  %1455 = vmatpush.bf16.msra.mxu0 %v1262
  %1456 = vmatpush.bf16.msra.mxu0 %v1062
  %1457 = vmatpush.bf16.msra.mxu0 %v1057
  %1458 = vmatpush.bf16.msra.mxu0 %v1052
  %1459 = vmatpush.bf16.msra.mxu0 %v1047
  %1460 = vmatmul.bf16.gmra.mxu0 %v1252
  %v1461 = vpop.f32.mrf.mxu0
  %v1462 = vadd.f32 %v1449, %v1461
  %v1463 = vpop.f32.mrf.mxu0
  %1464 = vdwg.mxu0
  %1465 = vmatpush.bf16.msra.mxu0 %v923
  %1466 = vmatpush.bf16.msra.mxu0 %v918
  %1467 = vmatpush.bf16.msra.mxu0 %v913
  %1468 = vmatpush.bf16.msra.mxu0 %v908
  %1469 = vmatpush.bf16.msra.mxu0 %v903
  %1470 = vmatpush.bf16.msra.mxu0 %v898
  %1471 = vmatpush.bf16.msra.mxu0 %v893
  %1472 = vmatpush.bf16.msra.mxu0 %v888
  %1473 = vmatmul.bf16.gmra.mxu0 %v284
  %v1474 = vpop.f32.mrf.mxu0
  %v1475 = vadd.f32 %v269, %v1474
  %v1476 = vpop.f32.mrf.mxu0
  %1477 = vdwg.mxu0
  %1478 = vmatpush.bf16.msra.mxu0 %v963
  %1479 = vmatpush.bf16.msra.mxu0 %v958
  %1480 = vmatpush.bf16.msra.mxu0 %v953
  %1481 = vmatpush.bf16.msra.mxu0 %v948
  %1482 = vmatpush.bf16.msra.mxu0 %v943
  %1483 = vmatpush.bf16.msra.mxu0 %v938
  %1484 = vmatpush.bf16.msra.mxu0 %v933
  %1485 = vmatpush.bf16.msra.mxu0 %v928
  %1486 = vmatmul.bf16.gmra.mxu0 %v285
  %v1487 = vpop.f32.mrf.mxu0
  %v1488 = vadd.f32 %v1475, %v1487
  %v1489 = vpop.f32.mrf.mxu0
  %1490 = vdwg.mxu0
  %1491 = vmatpush.bf16.msra.mxu0 %v1003
  %1492 = vmatpush.bf16.msra.mxu0 %v998
  %1493 = vmatpush.bf16.msra.mxu0 %v993
  %1494 = vmatpush.bf16.msra.mxu0 %v988
  %1495 = vmatpush.bf16.msra.mxu0 %v983
  %1496 = vmatpush.bf16.msra.mxu0 %v978
  %1497 = vmatpush.bf16.msra.mxu0 %v973
  %1498 = vmatpush.bf16.msra.mxu0 %v968
  %1499 = vmatmul.bf16.gmra.mxu0 %v286
  %v1500 = vpop.f32.mrf.mxu0
  %v1501 = vadd.f32 %v1488, %v1500
  %v1502 = vpop.f32.mrf.mxu0
  %1503 = vdwg.mxu0
  %1504 = vmatpush.bf16.msra.mxu0 %v1043
  %1505 = vmatpush.bf16.msra.mxu0 %v1038
  %1506 = vmatpush.bf16.msra.mxu0 %v1033
  %1507 = vmatpush.bf16.msra.mxu0 %v1028
  %1508 = vmatpush.bf16.msra.mxu0 %v1023
  %1509 = vmatpush.bf16.msra.mxu0 %v1018
  %1510 = vmatpush.bf16.msra.mxu0 %v1013
  %1511 = vmatpush.bf16.msra.mxu0 %v1008
  %1512 = vmatmul.bf16.gmra.mxu0 %v287
  %v1513 = vpop.f32.mrf.mxu0
  %v1514 = vadd.f32 %v1501, %v1513
  %v1515 = vpop.f32.mrf.mxu0
  %1516 = vdwg.mxu0
  %1517 = vmatpush.bf16.msra.mxu0 0
  %1518 = vmatpush.bf16.msra.mxu0 0
  %1519 = vmatpush.bf16.msra.mxu0 0
  %1520 = vmatpush.bf16.msra.mxu0 %v1265
  %1521 = vmatpush.bf16.msra.mxu0 %v1063
  %1522 = vmatpush.bf16.msra.mxu0 %v1058
  %1523 = vmatpush.bf16.msra.mxu0 %v1053
  %1524 = vmatpush.bf16.msra.mxu0 %v1048
  %1525 = vmatmul.bf16.gmra.mxu0 %v1252
  %v1526 = vpop.f32.mrf.mxu0
  %v1527 = vadd.f32 %v1514, %v1526
  %v1528 = vpop.f32.mrf.mxu0
  %1529 = vdwg.mxu0
  %1530 = vmatpush.bf16.msra.mxu0 %v924
  %1531 = vmatpush.bf16.msra.mxu0 %v919
  %1532 = vmatpush.bf16.msra.mxu0 %v914
  %1533 = vmatpush.bf16.msra.mxu0 %v909
  %1534 = vmatpush.bf16.msra.mxu0 %v904
  %1535 = vmatpush.bf16.msra.mxu0 %v899
  %1536 = vmatpush.bf16.msra.mxu0 %v894
  %1537 = vmatpush.bf16.msra.mxu0 %v889
  %1538 = vmatmul.bf16.gmra.mxu0 %v284
  %v1539 = vpop.f32.mrf.mxu0
  %v1540 = vadd.f32 %v270, %v1539
  %v1541 = vpop.f32.mrf.mxu0
  %1542 = vdwg.mxu0
  %1543 = vmatpush.bf16.msra.mxu0 %v964
  %1544 = vmatpush.bf16.msra.mxu0 %v959
  %1545 = vmatpush.bf16.msra.mxu0 %v954
  %1546 = vmatpush.bf16.msra.mxu0 %v949
  %1547 = vmatpush.bf16.msra.mxu0 %v944
  %1548 = vmatpush.bf16.msra.mxu0 %v939
  %1549 = vmatpush.bf16.msra.mxu0 %v934
  %1550 = vmatpush.bf16.msra.mxu0 %v929
  %1551 = vmatmul.bf16.gmra.mxu0 %v285
  %v1552 = vpop.f32.mrf.mxu0
  %v1553 = vadd.f32 %v1540, %v1552
  %v1554 = vpop.f32.mrf.mxu0
  %1555 = vdwg.mxu0
  %1556 = vmatpush.bf16.msra.mxu0 %v1004
  %1557 = vmatpush.bf16.msra.mxu0 %v999
  %1558 = vmatpush.bf16.msra.mxu0 %v994
  %1559 = vmatpush.bf16.msra.mxu0 %v989
  %1560 = vmatpush.bf16.msra.mxu0 %v984
  %1561 = vmatpush.bf16.msra.mxu0 %v979
  %1562 = vmatpush.bf16.msra.mxu0 %v974
  %1563 = vmatpush.bf16.msra.mxu0 %v969
  %1564 = vmatmul.bf16.gmra.mxu0 %v286
  %v1565 = vpop.f32.mrf.mxu0
  %v1566 = vadd.f32 %v1553, %v1565
  %v1567 = vpop.f32.mrf.mxu0
  %1568 = vdwg.mxu0
  %1569 = vmatpush.bf16.msra.mxu0 %v1044
  %1570 = vmatpush.bf16.msra.mxu0 %v1039
  %1571 = vmatpush.bf16.msra.mxu0 %v1034
  %1572 = vmatpush.bf16.msra.mxu0 %v1029
  %1573 = vmatpush.bf16.msra.mxu0 %v1024
  %1574 = vmatpush.bf16.msra.mxu0 %v1019
  %1575 = vmatpush.bf16.msra.mxu0 %v1014
  %1576 = vmatpush.bf16.msra.mxu0 %v1009
  %1577 = vmatmul.bf16.gmra.mxu0 %v287
  %v1578 = vpop.f32.mrf.mxu0
  %v1579 = vadd.f32 %v1566, %v1578
  %v1580 = vpop.f32.mrf.mxu0
  %1581 = vdwg.mxu0
  %1582 = vmatpush.bf16.msra.mxu0 0
  %1583 = vmatpush.bf16.msra.mxu0 0
  %1584 = vmatpush.bf16.msra.mxu0 0
  %1585 = vmatpush.bf16.msra.mxu0 %v1268
  %1586 = vmatpush.bf16.msra.mxu0 %v1064
  %1587 = vmatpush.bf16.msra.mxu0 %v1059
  %1588 = vmatpush.bf16.msra.mxu0 %v1054
  %1589 = vmatpush.bf16.msra.mxu0 %v1049
  %1590 = vmatmul.bf16.gmra.mxu0 %v1252
  %v1591 = vpop.f32.mrf.mxu0
  %v1592 = vadd.f32 %v1579, %v1591
  %v1593 = vpop.f32.mrf.mxu0
  %1594 = vdwg.mxu0
  %v1595 = vmax.f32 %v1332, 0.0
  %v1596 = vmax.f32 %v1397, 0.0
  %v1597 = vmax.f32 %v1462, 0.0
  %v1598 = vmax.f32 %v1527, 0.0
  %v1599 = vmax.f32 %v1592, 0.0
  %v1600 = vpack.c.bf16 %v1595, %v1595
  %v1601 = vpack.c.bf16 %v1596, %v1596
  %v1602 = vpack.c.bf16 %v1597, %v1597
  %v1603 = vpack.c.bf16 %v1598, %v1598
  %v1604 = vpack.c.bf16 %v1599, %v1599
  %v1605 = vld [vmem:[%s3] sm:$0xf]
  %v1606 = vld [vmem:[%s3 + $0x4] sm:$0xf]
  %v1607 = vld [vmem:[%s3 + $0x8] sm:$0xf]
  %v1608 = vld [vmem:[%s3 + $0xc] sm:$0xf]
  %v1609 = vld [vmem:[%s3 + $0x10] sm:$0xf]
  %v1610 = vld [vmem:[%s3 + $0x14] sm:$0xf]
  %v1611 = vld [vmem:[%s3 + $0x18] sm:$0xf]
  %v1612 = vld [vmem:[%s3 + $0x1c] sm:$0xf]
  %v1613 = vld [vmem:[%s3 + $0x20] sm:$0xf]
  %v1614 = vld [vmem:[%s3 + $0x24] sm:$0xf]
  %v1615 = vld [vmem:[%s3 + $0x28] sm:$0xf]
  %v1616 = vld [vmem:[%s3 + $0x2c] sm:$0xf]
  %v1617 = vld [vmem:[%s3 + $0x30] sm:$0xf]
  %v1618 = vld [vmem:[%s3 + $0x34] sm:$0xf]
  %v1619 = vld [vmem:[%s3 + $0x38] sm:$0xf]
  %v1620 = vld [vmem:[%s3 + $0x3c] sm:$0xf]
  %v1621 = vld [vmem:[%s3 + $0x40] sm:$0xf]
  %v1622 = vld [vmem:[%s3 + $0x44] sm:$0xf]
  %v1623 = vld [vmem:[%s3 + $0x48] sm:$0xf]
  %v1624 = vld [vmem:[%s3 + $0x4c] sm:$0xf]
  %v1625 = vld [vmem:[%s3 + $0x50] sm:$0xf]
  %v1626 = vld [vmem:[%s3 + $0x54] sm:$0xf]
  %v1627 = vld [vmem:[%s3 + $0x58] sm:$0xf]
  %v1628 = vld [vmem:[%s3 + $0x5c] sm:$0xf]
  %v1629 = vld [vmem:[%s3 + $0x60] sm:$0xf]
  %v1630 = vld [vmem:[%s3 + $0x64] sm:$0xf]
  %v1631 = vld [vmem:[%s3 + $0x68] sm:$0xf]
  %v1632 = vld [vmem:[%s3 + $0x6c] sm:$0xf]
  %v1633 = vld [vmem:[%s3 + $0x70] sm:$0xf]
  %v1634 = vld [vmem:[%s3 + $0x74] sm:$0xf]
  %v1635 = vld [vmem:[%s3 + $0x78] sm:$0xf]
  %v1636 = vld [vmem:[%s3 + $0x7c] sm:$0xf]
  %v1637 = vld [vmem:[%s3 + $0x80] sm:$0xf]
  %v1638 = vld [vmem:[%s3 + $0x84] sm:$0xf]
  %v1639 = vld [vmem:[%s3 + $0x88] sm:$0xf]
  %v1640 = vld [vmem:[%s3 + $0x8c] sm:$0xf]
  %v1641 = vld [vmem:[%s3 + $0x90] sm:$0xf]
  %v1642 = vld [vmem:[%s3 + $0x94] sm:$0xf]
  %v1643 = vld [vmem:[%s3 + $0x98] sm:$0xf]
  %v1644 = vld [vmem:[%s3 + $0x9c] sm:$0xf]
  %v1645 = vld [vmem:[%s3 + $0xa0] sm:$0xf]
  %v1646 = vld [vmem:[%s3 + $0xa4] sm:$0xf]
  %v1647 = vld [vmem:[%s3 + $0xa8] sm:$0xf]
  %v1648 = vld [vmem:[%s3 + $0xac] sm:$0xf]
  %v1649 = vld [vmem:[%s3 + $0xb0] sm:$0xf]
  %v1650 = vld [vmem:[%s3 + $0xb4] sm:$0xf]
  %v1651 = vld [vmem:[%s3 + $0xb8] sm:$0xf]
  %v1652 = vld [vmem:[%s3 + $0xbc] sm:$0xf]
  %v1653 = vld [vmem:[%s3 + $0xc0] sm:$0xf]
  %v1654 = vld [vmem:[%s3 + $0xc4] sm:$0xf]
  %v1655 = vld [vmem:[%s3 + $0xc8] sm:$0xf]
  %v1656 = vld [vmem:[%s3 + $0xcc] sm:$0xf]
  %v1657 = vld [vmem:[%s3 + $0xd0] sm:$0xf]
  %v1658 = vld [vmem:[%s3 + $0xd4] sm:$0xf]
  %v1659 = vld [vmem:[%s3 + $0xd8] sm:$0xf]
  %v1660 = vld [vmem:[%s3 + $0xdc] sm:$0xf]
  %v1661 = vld [vmem:[%s3 + $0xe0] sm:$0xf]
  %v1662 = vld [vmem:[%s3 + $0xe4] sm:$0xf]
  %v1663 = vld [vmem:[%s3 + $0xe8] sm:$0xf]
  %v1664 = vld [vmem:[%s3 + $0xec] sm:$0xf]
  %v1665 = vld [vmem:[%s3 + $0xf0] sm:$0xf]
  %v1666 = vld [vmem:[%s3 + $0xf4] sm:$0xf]
  %v1667 = vld [vmem:[%s3 + $0xf8] sm:$0xf]
  %v1668 = vld [vmem:[%s3 + $0xfc] sm:$0xf]
  %v1669 = vld [vmem:[%s3 + $0x100] sm:$0xf]
  %v1670 = vld [vmem:[%s3 + $0x104] sm:$0xf]
  %v1671 = vld [vmem:[%s3 + $0x108] sm:$0xf]
  %v1672 = vld [vmem:[%s3 + $0x10c] sm:$0xf]
  %v1673 = vld [vmem:[%s3 + $0x110] sm:$0xf]
  %v1674 = vld [vmem:[%s3 + $0x114] sm:$0xf]
  %v1675 = vld [vmem:[%s3 + $0x118] sm:$0xf]
  %v1676 = vld [vmem:[%s3 + $0x11c] sm:$0xf]
  %v1677 = vld [vmem:[%s3 + $0x120] sm:$0xf]
  %v1678 = vld [vmem:[%s3 + $0x124] sm:$0xf]
  %v1679 = vld [vmem:[%s3 + $0x128] sm:$0xf]
  %v1680 = vld [vmem:[%s4] sm:$0x1]
  %v1682 = vperm.slane %v1680, 0
  %v1759 = vunpack.c.l.b16 %v1605
  %v1760 = vunpack.c.l.b16 %v1606
  %v1761 = vunpack.c.l.b16 %v1607
  %v1762 = vunpack.c.l.b16 %v1608
  %v1763 = vunpack.c.l.b16 %v1609
  %v1764 = vunpack.c.l.b16 %v1610
  %v1765 = vunpack.c.l.b16 %v1611
  %v1766 = vunpack.c.l.b16 %v1612
  %v1767 = vunpack.c.l.b16 %v1613
  %v1768 = vunpack.c.l.b16 %v1614
  %v1769 = vunpack.c.l.b16 %v1615
  %v1770 = vunpack.c.l.b16 %v1616
  %v1771 = vunpack.c.l.b16 %v1617
  %v1772 = vunpack.c.l.b16 %v1618
  %v1773 = vunpack.c.l.b16 %v1619
  %v1774 = vunpack.c.l.b16 %v1620
  %v1775 = vunpack.c.l.b16 %v1621
  %v1776 = vunpack.c.l.b16 %v1622
  %v1777 = vunpack.c.l.b16 %v1623
  %v1778 = vunpack.c.l.b16 %v1624
  %v1779 = vunpack.c.l.b16 %v1625
  %v1780 = vunpack.c.l.b16 %v1626
  %v1781 = vunpack.c.l.b16 %v1627
  %v1782 = vunpack.c.l.b16 %v1628
  %v1783 = vunpack.c.l.b16 %v1629
  %v1784 = vunpack.c.l.b16 %v1630
  %v1785 = vunpack.c.l.b16 %v1631
  %v1786 = vunpack.c.l.b16 %v1632
  %v1787 = vunpack.c.l.b16 %v1633
  %v1788 = vunpack.c.l.b16 %v1634
  %v1789 = vunpack.c.l.b16 %v1635
  %v1790 = vunpack.c.l.b16 %v1636
  %v1791 = vunpack.c.l.b16 %v1637
  %v1792 = vunpack.c.l.b16 %v1638
  %v1793 = vunpack.c.l.b16 %v1639
  %v1794 = vunpack.c.l.b16 %v1640
  %v1795 = vunpack.c.l.b16 %v1641
  %v1796 = vunpack.c.l.b16 %v1642
  %v1797 = vunpack.c.l.b16 %v1643
  %v1798 = vunpack.c.l.b16 %v1644
  %v1799 = vunpack.c.l.b16 %v1645
  %v1800 = vunpack.c.l.b16 %v1646
  %v1801 = vunpack.c.l.b16 %v1647
  %v1802 = vunpack.c.l.b16 %v1648
  %v1803 = vunpack.c.l.b16 %v1649
  %v1804 = vunpack.c.l.b16 %v1650
  %v1805 = vunpack.c.l.b16 %v1651
  %v1806 = vunpack.c.l.b16 %v1652
  %v1807 = vunpack.c.l.b16 %v1653
  %v1808 = vunpack.c.l.b16 %v1654
  %v1809 = vunpack.c.l.b16 %v1655
  %v1810 = vunpack.c.l.b16 %v1656
  %v1811 = vunpack.c.l.b16 %v1657
  %v1812 = vunpack.c.l.b16 %v1658
  %v1813 = vunpack.c.l.b16 %v1659
  %v1814 = vunpack.c.l.b16 %v1660
  %v1815 = vunpack.c.l.b16 %v1661
  %v1816 = vunpack.c.l.b16 %v1662
  %v1817 = vunpack.c.l.b16 %v1663
  %v1818 = vunpack.c.l.b16 %v1664
  %v1819 = vunpack.c.l.b16 %v1665
  %v1820 = vunpack.c.l.b16 %v1666
  %v1821 = vunpack.c.l.b16 %v1667
  %v1822 = vunpack.c.l.b16 %v1668
  %v1823 = vunpack.c.l.b16 %v1669
  %v1824 = vunpack.c.l.b16 %v1670
  %v1825 = vunpack.c.l.b16 %v1671
  %v1826 = vunpack.c.l.b16 %v1672
  %v1827 = vunpack.c.l.b16 %v1673
  %v1828 = vunpack.c.l.b16 %v1674
  %v1829 = vunpack.c.l.b16 %v1675
  %v1830 = vunpack.c.l.b16 %v1676
  %v1831 = vunpack.c.l.b16 %v1677
  %v1832 = vunpack.c.l.b16 %v1678
  %v1833 = vunpack.c.l.b16 %v1679
  %v1834 = vpack.c.b16 %v1760, %v1759
  %v1835 = vpack.c.b16 %v1762, %v1761
  %v1836 = vpack.c.b16 %v1764, %v1763
  %v1837 = vpack.c.b16 %v1766, %v1765
  %v1838 = vpack.c.b16 %v1768, %v1767
  %v1839 = vpack.c.b16 %v1770, %v1769
  %v1840 = vpack.c.b16 %v1772, %v1771
  %v1841 = vpack.c.b16 %v1774, %v1773
  %v1842 = vpack.c.b16 %v1776, %v1775
  %v1843 = vpack.c.b16 %v1778, %v1777
  %v1844 = vpack.c.b16 %v1780, %v1779
  %v1845 = vpack.c.b16 %v1782, %v1781
  %v1846 = vpack.c.b16 %v1784, %v1783
  %v1847 = vpack.c.b16 %v1786, %v1785
  %v1848 = vpack.c.b16 %v1788, %v1787
  %v1849 = vpack.c.b16 %v1790, %v1789
  %v1850 = vpack.c.b16 %v1792, %v1791
  %v1851 = vpack.c.b16 %v1794, %v1793
  %v1852 = vpack.c.b16 %v1796, %v1795
  %v1853 = vpack.c.b16 %v1798, %v1797
  %v1854 = vpack.c.b16 %v1800, %v1799
  %v1855 = vpack.c.b16 %v1802, %v1801
  %v1856 = vpack.c.b16 %v1804, %v1803
  %v1857 = vpack.c.b16 %v1806, %v1805
  %v1858 = vpack.c.b16 %v1808, %v1807
  %v1859 = vpack.c.b16 %v1810, %v1809
  %v1860 = vpack.c.b16 %v1812, %v1811
  %v1861 = vpack.c.b16 %v1814, %v1813
  %v1862 = vpack.c.b16 %v1816, %v1815
  %v1863 = vpack.c.b16 %v1818, %v1817
  %v1864 = vpack.c.b16 %v1820, %v1819
  %v1865 = vpack.c.b16 %v1822, %v1821
  %v1866 = vpack.c.b16 %v1824, %v1823
  %v1867 = vpack.c.b16 %v1826, %v1825
  %v1868 = vpack.c.b16 %v1828, %v1827
  %v1869 = vpack.c.b16 %v1830, %v1829
  %v1870 = vpack.c.b16 %v1832, %v1831
  %v1871 = vpack.c.b16 %v1833, %v1833
  %vm1909 = vcmask 719872
  %v1911 = vsel %vm1909, %v1604, 0
  %vm1913 = vcmask 1043456
  %v1915 = vsel %vm1913, %v1871, 0
  %1917 = vmatpush.bf16.msra.mxu0 %v1841
  %1918 = vmatpush.bf16.msra.mxu0 %v1840
  %1919 = vmatpush.bf16.msra.mxu0 %v1839
  %1920 = vmatpush.bf16.msra.mxu0 %v1838
  %1921 = vmatpush.bf16.msra.mxu0 %v1837
  %1922 = vmatpush.bf16.msra.mxu0 %v1836
  %1923 = vmatpush.bf16.msra.mxu0 %v1835
  %1924 = vmatpush.bf16.msra.mxu0 %v1834
  %1925 = vmatmul.bf16.gmra.mxu0 %v1600
  %v1926 = vpop.f32.mrf.mxu0
  %v1927 = vadd.f32 %v1682, %v1926
  %v1928 = vpop.f32.mrf.mxu0
  %1929 = vdwg.mxu0
  %1930 = vmatpush.bf16.msra.mxu0 %v1849
  %1931 = vmatpush.bf16.msra.mxu0 %v1848
  %1932 = vmatpush.bf16.msra.mxu0 %v1847
  %1933 = vmatpush.bf16.msra.mxu0 %v1846
  %1934 = vmatpush.bf16.msra.mxu0 %v1845
  %1935 = vmatpush.bf16.msra.mxu0 %v1844
  %1936 = vmatpush.bf16.msra.mxu0 %v1843
  %1937 = vmatpush.bf16.msra.mxu0 %v1842
  %1938 = vmatmul.bf16.gmra.mxu0 %v1601
  %v1939 = vpop.f32.mrf.mxu0
  %v1940 = vadd.f32 %v1927, %v1939
  %v1941 = vpop.f32.mrf.mxu0
  %1942 = vdwg.mxu0
  %1943 = vmatpush.bf16.msra.mxu0 %v1857
  %1944 = vmatpush.bf16.msra.mxu0 %v1856
  %1945 = vmatpush.bf16.msra.mxu0 %v1855
  %1946 = vmatpush.bf16.msra.mxu0 %v1854
  %1947 = vmatpush.bf16.msra.mxu0 %v1853
  %1948 = vmatpush.bf16.msra.mxu0 %v1852
  %1949 = vmatpush.bf16.msra.mxu0 %v1851
  %1950 = vmatpush.bf16.msra.mxu0 %v1850
  %1951 = vmatmul.bf16.gmra.mxu0 %v1602
  %v1952 = vpop.f32.mrf.mxu0
  %v1953 = vadd.f32 %v1940, %v1952
  %v1954 = vpop.f32.mrf.mxu0
  %1955 = vdwg.mxu0
  %1956 = vmatpush.bf16.msra.mxu0 %v1865
  %1957 = vmatpush.bf16.msra.mxu0 %v1864
  %1958 = vmatpush.bf16.msra.mxu0 %v1863
  %1959 = vmatpush.bf16.msra.mxu0 %v1862
  %1960 = vmatpush.bf16.msra.mxu0 %v1861
  %1961 = vmatpush.bf16.msra.mxu0 %v1860
  %1962 = vmatpush.bf16.msra.mxu0 %v1859
  %1963 = vmatpush.bf16.msra.mxu0 %v1858
  %1964 = vmatmul.bf16.gmra.mxu0 %v1603
  %v1965 = vpop.f32.mrf.mxu0
  %v1966 = vadd.f32 %v1953, %v1965
  %v1967 = vpop.f32.mrf.mxu0
  %1968 = vdwg.mxu0
  %1969 = vmatpush.bf16.msra.mxu0 0
  %1970 = vmatpush.bf16.msra.mxu0 0
  %1971 = vmatpush.bf16.msra.mxu0 %v1915
  %1972 = vmatpush.bf16.msra.mxu0 %v1870
  %1973 = vmatpush.bf16.msra.mxu0 %v1869
  %1974 = vmatpush.bf16.msra.mxu0 %v1868
  %1975 = vmatpush.bf16.msra.mxu0 %v1867
  %1976 = vmatpush.bf16.msra.mxu0 %v1866
  %1977 = vmatmul.bf16.gmra.mxu0 %v1911
  %v1978 = vpop.f32.mrf.mxu0
  %v1979 = vadd.f32 %v1966, %v1978
  %v1980 = vpop.f32.mrf.mxu0
  %1981 = vdwg.mxu0
  %v1982 = vmax.f32 %v1979, 0.0
  %v1983 = vpack.c.bf16 %v1982, %v1982
  %v1984 = vld [vmem:[%s5] sm:$0xf]
  %v1985 = vld [vmem:[%s5 + $0x4] sm:$0xf]
  %v1986 = vld [vmem:[%s6] sm:$0x1]
  %v1988 = vperm.slane %v1986, 0
  %v1992 = vunpack.c.l.b16 %v1984
  %v1993 = vunpack.c.l.b16 %v1985
  %v1994 = vpack.c.b16 %v1993, %v1992
  %vm1996 = vcmask 130048
  %v1998 = vsel %vm1996, %v1983, 0
  %2000 = vmatpush.bf16.msra.mxu0 0
  %2001 = vmatpush.bf16.msra.mxu0 0
  %2002 = vmatpush.bf16.msra.mxu0 0
  %2003 = vmatpush.bf16.msra.mxu0 0
  %2004 = vmatpush.bf16.msra.mxu0 0
  %2005 = vmatpush.bf16.msra.mxu0 0
  %2006 = vmatpush.bf16.msra.mxu0 0
  %2007 = vmatpush.bf16.msra.mxu0 %v1994
  %2008 = vmatmul.bf16.gmra.mxu0 %v1998
  %v2009 = vpop.f32.mrf.mxu0
  %v2010 = vadd.f32 %v1988, %v2009
  %v2011 = vpop.f32.mrf.mxu0
  %2012 = vdwg.mxu0
  %v2013 = vmax.f32 %v2010, 0.0
  %v2014 = vpack.c.bf16 %v2013, %v2013
  %v2015 = vld [vmem:[%s7] sm:$0xf]
  %v2016 = vld [vmem:[%s7 + $0x4] sm:$0xf]
  %v2017 = vld [vmem:[%s7 + $0x8] sm:$0xf]
  %v2018 = vld [vmem:[%s7 + $0xc] sm:$0xf]
  %v2019 = vld [vmem:[%s7 + $0x10] sm:$0xf]
  %v2020 = vld [vmem:[%s7 + $0x14] sm:$0xf]
  %v2021 = vld [vmem:[%s7 + $0x18] sm:$0xf]
  %v2022 = vld [vmem:[%s7 + $0x1c] sm:$0xf]
  %v2023 = vld [vmem:[%s7 + $0x20] sm:$0xf]
  %v2024 = vld [vmem:[%s7 + $0x24] sm:$0xf]
  %v2025 = vld [vmem:[%s7 + $0x28] sm:$0xf]
  %v2026 = vld [vmem:[%s7 + $0x2c] sm:$0xf]
  %v2027 = vld [vmem:[%s7 + $0x30] sm:$0xf]
  %v2028 = vld [vmem:[%s7 + $0x34] sm:$0xf]
  %v2029 = vld [vmem:[%s7 + $0x38] sm:$0xf]
  %v2030 = vld [vmem:[%s8] sm:$0x1]
  %v2032 = vperm.slane %v2030, 0
  %v2049 = vunpack.c.l.b16 %v2015
  %v2050 = vunpack.c.l.b16 %v2016
  %v2051 = vunpack.c.l.b16 %v2017
  %v2052 = vunpack.c.l.b16 %v2018
  %v2053 = vunpack.c.l.b16 %v2019
  %v2054 = vunpack.c.l.b16 %v2020
  %v2055 = vunpack.c.l.b16 %v2021
  %v2056 = vunpack.c.l.b16 %v2022
  %v2057 = vunpack.c.l.b16 %v2023
  %v2058 = vunpack.c.l.b16 %v2024
  %v2059 = vunpack.c.l.b16 %v2025
  %v2060 = vunpack.c.l.b16 %v2026
  %v2061 = vunpack.c.l.b16 %v2027
  %v2062 = vunpack.c.l.b16 %v2028
  %v2063 = vunpack.c.l.b16 %v2029
  %v2064 = vpack.c.b16 %v2050, %v2049
  %v2065 = vpack.c.b16 %v2052, %v2051
  %v2066 = vpack.c.b16 %v2054, %v2053
  %v2067 = vpack.c.b16 %v2056, %v2055
  %v2068 = vpack.c.b16 %v2058, %v2057
  %v2069 = vpack.c.b16 %v2060, %v2059
  %v2070 = vpack.c.b16 %v2062, %v2061
  %v2071 = vpack.c.b16 %v2063, %v2063
  %vm2079 = vcmask 982016
  %v2081 = vsel %vm2079, %v2014, 0
  %v2084 = vsel %vm1913, %v2071, 0
  %2086 = vmatpush.bf16.msra.mxu0 %v2084
  %2087 = vmatpush.bf16.msra.mxu0 %v2070
  %2088 = vmatpush.bf16.msra.mxu0 %v2069
  %2089 = vmatpush.bf16.msra.mxu0 %v2068
  %2090 = vmatpush.bf16.msra.mxu0 %v2067
  %2091 = vmatpush.bf16.msra.mxu0 %v2066
  %2092 = vmatpush.bf16.msra.mxu0 %v2065
  %2093 = vmatpush.bf16.msra.mxu0 %v2064
  %2094 = vmatmul.bf16.gmra.mxu0 %v2081
  %v2095 = vpop.f32.mrf.mxu0
  %v2096 = vadd.f32 %v2032, %v2095
  %v2097 = vpop.f32.mrf.mxu0
  %2098 = vdwg.mxu0
  %v2099 = vmax.f32 %v2096, 0.0
  %v2100 = vpack.c.bf16 %v2099, %v2099
  %v2101 = vld [vmem:[%s9] sm:$0xf]
  %v2102 = vld [vmem:[%s9 + $0x4] sm:$0xf]
  %v2103 = vld [vmem:[%s9 + $0x8] sm:$0xf]
  %v2104 = vld [vmem:[%s9 + $0xc] sm:$0xf]
  %v2105 = vld [vmem:[%s9 + $0x10] sm:$0xf]
  %v2106 = vld [vmem:[%s9 + $0x14] sm:$0xf]
  %v2107 = vld [vmem:[%s9 + $0x18] sm:$0xf]
  %v2108 = vld [vmem:[%s9 + $0x1c] sm:$0xf]
  %v2109 = vld [vmem:[%s9 + $0x20] sm:$0xf]
  %v2110 = vld [vmem:[%s9 + $0x24] sm:$0xf]
  %v2111 = vld [vmem:[%s9 + $0x28] sm:$0x3]
  %v2112 = vld [vmem:[%s10] sm:$0x1]
  %v2114 = vperm.slane %v2112, 0
  %v2127 = vunpack.c.l.b16 %v2101
  %v2128 = vunpack.c.l.b16 %v2102
  %v2129 = vunpack.c.l.b16 %v2103
  %v2130 = vunpack.c.l.b16 %v2104
  %v2131 = vunpack.c.l.b16 %v2105
  %v2132 = vunpack.c.l.b16 %v2106
  %v2133 = vunpack.c.l.b16 %v2107
  %v2134 = vunpack.c.l.b16 %v2108
  %v2135 = vunpack.c.l.b16 %v2109
  %v2136 = vunpack.c.l.b16 %v2110
  %v2137 = vunpack.c.l.b16 %v2111
  %v2138 = vpack.c.b16 %v2128, %v2127
  %v2139 = vpack.c.b16 %v2130, %v2129
  %v2140 = vpack.c.b16 %v2132, %v2131
  %v2141 = vpack.c.b16 %v2134, %v2133
  %v2142 = vpack.c.b16 %v2136, %v2135
  %v2143 = vpack.c.b16 %v2137, %v2137
  %vm2149 = vcmask 687104
  %v2151 = vsel %vm2149, %v2100, 0
  %vm2153 = vcmask 1041408
  %v2155 = vsel %vm2153, %v2143, 0
  %2157 = vmatpush.bf16.msra.mxu0 0
  %2158 = vmatpush.bf16.msra.mxu0 0
  %2159 = vmatpush.bf16.msra.mxu0 %v2155
  %2160 = vmatpush.bf16.msra.mxu0 %v2142
  %2161 = vmatpush.bf16.msra.mxu0 %v2141
  %2162 = vmatpush.bf16.msra.mxu0 %v2140
  %2163 = vmatpush.bf16.msra.mxu0 %v2139
  %2164 = vmatpush.bf16.msra.mxu0 %v2138
  %2165 = vmatmul.bf16.gmra.mxu0 %v2151
  %v2166 = vpop.f32.mrf.mxu0
  %v2167 = vadd.f32 %v2114, %v2166
  %v2168 = vpop.f32.mrf.mxu0
  %2169 = vdwg.mxu0
  %vm2170 = vcmask 80896
  %2171 = vst.msk [vmem:[%s11] sm:$0xff] %vm2170, %v2167
  // Predicated region
  $region46: #{cnn_forward.1} parent=0 // pred_check
    _
  $region47: #{cnn_forward.1} parent=0 // pred_check_branch
    %2173 = sbr.rel (0) target = $region49
  $region48: #{cnn_forward.1} parent=0 // pred_region
    _
  $region49: #{cnn_forward.1} parent=0 // pred_fallthru
    _
  // Predicated region
  $region50: #{cnn_forward.1} parent=0 // pred_check
    _
  $region51: #{cnn_forward.1} parent=0 // pred_check_branch
    %2175 = sbr.rel (0) target = $region53
  $region52: #{cnn_forward.1} parent=0 // pred_region
    _
  $region53: #{cnn_forward.1} parent=0 // pred_fallthru
    _

</llo_original>
